<compile_context>
chip_gen: v7x
topology: tpu7x:2x2x1
jax: 0.10.0
libtpu: 0.0.40
codegen_flags: <defaults>
</compile_context>

<pallas_src>
import functools

import jax
import jax.numpy as jnp
from jax import lax
from jax.experimental import pallas as pl
from jax.experimental.pallas import tpu as pltpu

EPS = 1e-8


def _round_up(a, m):
    return -(-a // m) * m


def _fused_mlp_kernel(x_ref, *refs, n_layers):
    """Fused demodulated-MLP for one (batch, point-tile) grid cell.

    x_ref        : (1, in_pad, tile_n)   input points, points on lanes
    refs[:L]     : per-layer effective weights, each (1, Cout_l, Cin_l)
    refs[L:2L]   : per-layer biases, each (Cout_l, 1)
    refs[2L]     : output ref, (1, out_dim, tile_n)
    """
    w_refs = refs[:n_layers]
    b_refs = refs[n_layers:2 * n_layers]
    o_ref = refs[2 * n_layers]

    h = x_ref[0]                                        # (in_pad, tile_n)
    for li in range(n_layers):
        w = w_refs[li][0]                               # (Cout, Cin) effective weight
        rhs = h if h.dtype == w.dtype else h.astype(w.dtype)   # bf16 MXU operands
        h = jnp.dot(w, rhs, preferred_element_type=jnp.float32) + b_refs[li][...]
        if li < n_layers - 1:
            h = jnp.maximum(h, 0.0)                     # ReLU, f32 epilogue
    o_ref[0] = h.astype(o_ref.dtype)


def latent_demodulated_forward(lat, xyz, params, *, output_scale=None,
                               tile_n=2048, eps=EPS,
                               compute_dtype=jnp.bfloat16, out_dtype=None):
    """Forward pass of LatentDemodulated.  lat: (B,1,L), xyz: (B,N,input_dim)."""
    B, N, in_dim = xyz.shape
    n_layers = len(params)
    lat2 = lat.reshape(B, -1).astype(jnp.float32)        # (B, L)

    # --- fold modulation/demodulation (+ output_scale) into per-batch effective
    #     weights, already transposed for the points-on-lanes layout (Cout, Cin) ---
    w_effs, biases = [], []
    for li, p in enumerate(params):
        w = p["w"].astype(jnp.float32)                               # (Cout, Cin)
        s = lat2 @ p["sw_t"] + p["sb"]                               # (B, Cin)
        demod = lax.rsqrt((s * s) @ (w * w).T + eps)                 # (B, Cout)
        w_eff = demod[:, :, None] * w[None, :, :] * s[:, None, :]    # (B, Cout, Cin)
        bias = p["b"].astype(jnp.float32).reshape(-1, 1)             # (Cout, 1)
        if li == n_layers - 1 and output_scale is not None:
            w_eff = w_eff * output_scale
            bias = bias * output_scale
        w_effs.append(w_eff)
        biases.append(bias)

    # bf16 MXU operands for hidden layers; keep xyz and layer-0 weights in f32 for
    # positional precision. Accumulation and bias/ReLU epilogue stay f32 in-kernel.
    if compute_dtype is not None and compute_dtype != jnp.float32:
        w_effs = [w_effs[0]] + [w.astype(compute_dtype) for w in w_effs[1:]]

    # --- points-on-lanes layout: x -> (B, in_pad, n_pad); pad the narrow channel dim
    #     to 8 sublanes with matching zero columns in W_eff[0] (math is exact) ---
    x = jnp.swapaxes(xyz.astype(jnp.float32), 1, 2)      # (B, in_dim, N)
    in_pad = _round_up(in_dim, 8)
    if in_pad != in_dim:
        x = jnp.pad(x, ((0, 0), (0, in_pad - in_dim), (0, 0)))
        w_effs[0] = jnp.pad(w_effs[0], ((0, 0), (0, 0), (0, in_pad - in_dim)))

    out_dim = w_effs[-1].shape[1]
    if out_dtype is None:
        out_dtype = xyz.dtype

    # --- tile_n selection: multiple of 128, capped by N, shrunk to a VMEM budget ---
    n128 = _round_up(N, 128)
    tile_n = max(128, min(_round_up(tile_n, 128), n128))

    try:
        info = pltpu.get_tpu_info()
        vmem_cap = int(getattr(info, "vmem_capacity_bytes", 0)) or (64 << 20)
    except Exception:  # pragma: no cover - defensive fallback
        vmem_cap = 64 << 20

    def vmem_estimate(tn):
        est = 2 * in_pad * tn * x.dtype.itemsize                       # in tile (2x buf)
        est += 2 * out_dim * tn * jnp.dtype(out_dtype).itemsize        # out tile (2x buf)
        for w in w_effs:                                               # resident weights
            est += 2 * w.shape[1] * w.shape[2] * w.dtype.itemsize
        for bb in biases:
            est += 2 * bb.size * 4
        c_max = max(w.shape[1] for w in w_effs)
        est += 3 * c_max * tn * 4                                      # live f32 activations
        return est

    budget = int(vmem_cap * 0.45)
    while vmem_estimate(tile_n) > budget and tile_n > 128:
        tile_n = max(128, _round_up(tile_n // 2, 128))

    n_pad = _round_up(N, tile_n)
    # Megacore friendliness: avoid a degenerate single-cell grid when B == 1.
    if B == 1 and n_pad // tile_n == 1 and tile_n >= 256:
        tile_n = max(128, _round_up(tile_n // 2, 128))
        n_pad = _round_up(N, tile_n)
    if n_pad != N:
        x = jnp.pad(x, ((0, 0), (0, 0), (0, n_pad - N)))
    n_tiles = n_pad // tile_n

    in_specs = [pl.BlockSpec((1, in_pad, tile_n), lambda b, n: (b, 0, n))]
    for w in w_effs:   # per-batch effective weight, constant across the point axis
        in_specs.append(
            pl.BlockSpec((1, w.shape[1], w.shape[2]), lambda b, n: (b, 0, 0)))
    for bb in biases:  # shared bias, constant across the whole grid
        in_specs.append(pl.BlockSpec((bb.shape[0], 1), lambda b, n: (0, 0)))

    kernel = functools.partial(_fused_mlp_kernel, n_layers=n_layers)
    vmem_limit = min(int(vmem_cap * 0.9),
                     max(32 << 20, 2 * vmem_estimate(tile_n)))

    out_t = pl.pallas_call(
        kernel,
        out_shape=jax.ShapeDtypeStruct((B, out_dim, n_pad), out_dtype),
        grid_spec=pltpu.PrefetchScalarGridSpec(
            num_scalar_prefetch=0,
            grid=(B, n_tiles),
            in_specs=in_specs,
            out_specs=pl.BlockSpec((1, out_dim, tile_n), lambda b, n: (b, 0, n)),
        ),
        compiler_params=pltpu.CompilerParams(
            dimension_semantics=("parallel", "parallel"),
            vmem_limit_bytes=vmem_limit),
    )(x, *w_effs, *biases)

    if n_pad != N:
        out_t = out_t[:, :, :N]
    return jnp.swapaxes(out_t, 1, 2)                 # (B, N, out_dim), module layout


def init_params(key, *, latent_dim, hidden_dim, n_layers, input_dim, output_dim,
                weight_norm=True, dtype=jnp.float32):
    """Deterministic parameter init for all DemodulatedLinear layers."""
    dims = [input_dim] + [hidden_dim] * (n_layers - 1) + [output_dim]
    params = []
    for li in range(n_layers):
        cin, cout = dims[li], dims[li + 1]
        key, k1, k2, k3 = jax.random.split(key, 4)
        # layer weight (PyTorch convention [out, in]), then weight_norm.
        v = jax.random.normal(k1, (cout, cin), dtype) * (1.0 / jnp.sqrt(cin))
        if weight_norm:
            g = jnp.linalg.norm(v, axis=1, keepdims=True)              # per-row g
            w = g * v / (jnp.linalg.norm(v, axis=1, keepdims=True) + 1e-12)
        else:
            w = v
        b = jax.random.normal(k2, (cout,), dtype) * 0.01
        # style mapping: Linear(latent_dim -> cin); bias init to 1 (identity-ish modulation)
        sw = jax.random.normal(k3, (cin, latent_dim), dtype) * (1.0 / jnp.sqrt(latent_dim))
        sb = jnp.ones((cin,), dtype)
        params.append(dict(
            sw_t=jnp.transpose(sw),            # (L, Cin)
            sb=sb.reshape(1, cin),             # (1, Cin)
            w=w,                               # (Cout, Cin) — PyTorch layout
            b=b.reshape(cout),                 # (Cout,)
        ))
    return params


def reference_forward(lat, xyz, params, *, output_scale=None):
    """Pure-JAX reference (same math as the PyTorch module)."""
    out = xyz
    n = len(params)
    for li, p in enumerate(params):
        w = p["w"]                                                  # (Cout, Cin)
        s = lat @ p["sw_t"] + p["sb"]                               # (B,1,Cin)
        demod = lax.rsqrt((s * s) @ (w * w).T + EPS)                # (B,1,Cout)
        out = ((out * s) @ w.T) * demod + p["b"].reshape(1, 1, -1)
        if li < n - 1:
            out = jnp.maximum(out, 0.0)
    if output_scale is not None:
        out = out * output_scale
    return out


if __name__ == "__main__":
    # Small config consistent with the module's defaults (scaled down).
    B, N = 2, 1024
    latent_dim, hidden_dim, n_layers = 32, 64, 4
    input_dim, output_dim = 3, 1
    output_scale = 0.1

    key = jax.random.PRNGKey(0)
    kp, kl, kx = jax.random.split(key, 3)

    params = init_params(kp, latent_dim=latent_dim, hidden_dim=hidden_dim,
                         n_layers=n_layers, input_dim=input_dim,
                         output_dim=output_dim, weight_norm=True)

    lat = jax.random.normal(kl, (B, 1, latent_dim), jnp.float32)   # [B, 1, L] latent
    xyz = jax.random.normal(kx, (B, N, input_dim), jnp.float32)    # [B, N, 3] positions

    ref = reference_forward(lat, xyz, params, output_scale=output_scale)

    # Exact-precision path (all-f32 MXU operands) — tight tolerance vs reference.
    out_f32 = latent_demodulated_forward(lat, xyz, params, output_scale=output_scale,
                                         compute_dtype=jnp.float32)
    out_f32 = jax.block_until_ready(out_f32)
    assert out_f32.shape == (B, N, output_dim), out_f32.shape
    assert jnp.allclose(out_f32, ref, rtol=2e-4, atol=2e-5), (
        "f32 mismatch vs reference, max abs err = %e"
        % float(jnp.max(jnp.abs(out_f32 - ref))))

    # Default path: bf16 MXU operands for hidden layers (f32 accumulate / epilogue).
    out_bf16 = latent_demodulated_forward(lat, xyz, params, output_scale=output_scale)
    out_bf16 = jax.block_until_ready(out_bf16)
    assert out_bf16.shape == (B, N, output_dim), out_bf16.shape
    err = float(jnp.max(jnp.abs(out_bf16 - ref)))
    scale = float(jnp.max(jnp.abs(ref))) + 1e-6
    assert err <= 0.03 * scale + 1e-3, "bf16 mismatch, max abs err = %e" % err

    print("KERNEL_OK")
</pallas_src>

<mosaic_0001>
module attributes {stable_mosaic.version = 11 : i64} {
  func.func @_fused_mlp_kernel(%arg0: i32, %arg1: i32, %arg2: memref<1x8x1024xf32, #tpu.memory_space<vmem>>, %arg3: memref<1x64x8xf32, #tpu.memory_space<vmem>>, %arg4: memref<1x64x64xf32, #tpu.memory_space<vmem>>, %arg5: memref<1x64x64xf32, #tpu.memory_space<vmem>>, %arg6: memref<1x1x64xf32, #tpu.memory_space<vmem>>, %arg7: memref<64x1xf32, #tpu.memory_space<vmem>>, %arg8: memref<64x1xf32, #tpu.memory_space<vmem>>, %arg9: memref<64x1xf32, #tpu.memory_space<vmem>>, %arg10: memref<1x1xf32, #tpu.memory_space<vmem>>, %arg11: memref<1x1x1024xf32, #tpu.memory_space<vmem>>) attributes {dimension_semantics = [#tpu.dimension_semantics<parallel>, #tpu.dimension_semantics<parallel>], iteration_bounds = array<i64: 2, 1>, scalar_prefetch = 0 : i64, scratch_operands = 0 : i64, tpu.core_type = #tpu.core_type<tc>, window_params = [{transform_indices = @transform_0, window_bounds = array<i64: 1, 8, 1024>}, {transform_indices = @transform_1, window_bounds = array<i64: 1, 64, 8>}, {transform_indices = @transform_2, window_bounds = array<i64: 1, 64, 64>}, {transform_indices = @transform_3, window_bounds = array<i64: 1, 64, 64>}, {transform_indices = @transform_4, window_bounds = array<i64: 1, 1, 64>}, {pipeline_mode = #tpu.pipeline_mode<synchronous>, transform_indices = @transform_5, window_bounds = array<i64: 64, 1>}, {pipeline_mode = #tpu.pipeline_mode<synchronous>, transform_indices = @transform_6, window_bounds = array<i64: 64, 1>}, {pipeline_mode = #tpu.pipeline_mode<synchronous>, transform_indices = @transform_7, window_bounds = array<i64: 64, 1>}, {pipeline_mode = #tpu.pipeline_mode<synchronous>, transform_indices = @transform_8, window_bounds = array<i64: 1, 1>}, {transform_indices = @transform_9, window_bounds = array<i64: 1, 1, 1024>}]} {
    %c0 = arith.constant 0 : index
    %c0_0 = arith.constant 0 : index
    %c0_1 = arith.constant 0 : index
    %0 = vector.load %arg2[%c0, %c0_0, %c0_1] : memref<1x8x1024xf32, #tpu.memory_space<vmem>>, vector<1x8x1024xf32>
    %1 = vector.shape_cast %0 : vector<1x8x1024xf32> to vector<8x1024xf32>
    %c0_2 = arith.constant 0 : index
    %c0_3 = arith.constant 0 : index
    %c0_4 = arith.constant 0 : index
    %2 = vector.load %arg3[%c0_2, %c0_3, %c0_4] : memref<1x64x8xf32, #tpu.memory_space<vmem>>, vector<1x64x8xf32>
    %3 = vector.shape_cast %2 : vector<1x64x8xf32> to vector<64x8xf32>
    %cst = arith.constant dense<0.000000e+00> : vector<64x1024xf32>
    %4 = tpu.matmul %3, %1, %cst {dimension_numbers = #tpu.dot_dimension_numbers<[1], [0], [0], [1], [0, 0, 1, 1], [], []>} : vector<64x8xf32>, vector<8x1024xf32>, vector<64x1024xf32> -> vector<64x1024xf32>
    %c0_5 = arith.constant 0 : index
    %c0_6 = arith.constant 0 : index
    %5 = vector.load %arg7[%c0_5, %c0_6] : memref<64x1xf32, #tpu.memory_space<vmem>>, vector<64x1xf32>
    %6 = vector.broadcast %5 : vector<64x1xf32> to vector<64x1024xf32>
    %7 = arith.addf %4, %6 : vector<64x1024xf32>
    %cst_7 = arith.constant 0.000000e+00 : f32
    %8 = vector.broadcast %cst_7 : f32 to vector<64x1024xf32>
    %9 = arith.maximumf %7, %8 : vector<64x1024xf32>
    %c0_8 = arith.constant 0 : index
    %c0_9 = arith.constant 0 : index
    %c0_10 = arith.constant 0 : index
    %10 = vector.load %arg4[%c0_8, %c0_9, %c0_10] : memref<1x64x64xf32, #tpu.memory_space<vmem>>, vector<1x64x64xf32>
    %11 = vector.shape_cast %10 : vector<1x64x64xf32> to vector<64x64xf32>
    %cst_11 = arith.constant dense<0.000000e+00> : vector<64x1024xf32>
    %12 = tpu.matmul %11, %9, %cst_11 {dimension_numbers = #tpu.dot_dimension_numbers<[1], [0], [0], [1], [0, 0, 1, 1], [], []>} : vector<64x64xf32>, vector<64x1024xf32>, vector<64x1024xf32> -> vector<64x1024xf32>
    %c0_12 = arith.constant 0 : index
    %c0_13 = arith.constant 0 : index
    %13 = vector.load %arg8[%c0_12, %c0_13] : memref<64x1xf32, #tpu.memory_space<vmem>>, vector<64x1xf32>
    %14 = vector.broadcast %13 : vector<64x1xf32> to vector<64x1024xf32>
    %15 = arith.addf %12, %14 : vector<64x1024xf32>
    %cst_14 = arith.constant 0.000000e+00 : f32
    %16 = vector.broadcast %cst_14 : f32 to vector<64x1024xf32>
    %17 = arith.maximumf %15, %16 : vector<64x1024xf32>
    %c0_15 = arith.constant 0 : index
    %c0_16 = arith.constant 0 : index
    %c0_17 = arith.constant 0 : index
    %18 = vector.load %arg5[%c0_15, %c0_16, %c0_17] : memref<1x64x64xf32, #tpu.memory_space<vmem>>, vector<1x64x64xf32>
    %19 = vector.shape_cast %18 : vector<1x64x64xf32> to vector<64x64xf32>
    %cst_18 = arith.constant dense<0.000000e+00> : vector<64x1024xf32>
    %20 = tpu.matmul %19, %17, %cst_18 {dimension_numbers = #tpu.dot_dimension_numbers<[1], [0], [0], [1], [0, 0, 1, 1], [], []>} : vector<64x64xf32>, vector<64x1024xf32>, vector<64x1024xf32> -> vector<64x1024xf32>
    %c0_19 = arith.constant 0 : index
    %c0_20 = arith.constant 0 : index
    %21 = vector.load %arg9[%c0_19, %c0_20] : memref<64x1xf32, #tpu.memory_space<vmem>>, vector<64x1xf32>
    %22 = vector.broadcast %21 : vector<64x1xf32> to vector<64x1024xf32>
    %23 = arith.addf %20, %22 : vector<64x1024xf32>
    %cst_21 = arith.constant 0.000000e+00 : f32
    %24 = vector.broadcast %cst_21 : f32 to vector<64x1024xf32>
    %25 = arith.maximumf %23, %24 : vector<64x1024xf32>
    %c0_22 = arith.constant 0 : index
    %c0_23 = arith.constant 0 : index
    %c0_24 = arith.constant 0 : index
    %26 = vector.load %arg6[%c0_22, %c0_23, %c0_24] : memref<1x1x64xf32, #tpu.memory_space<vmem>>, vector<1x1x64xf32>
    %27 = vector.shape_cast %26 : vector<1x1x64xf32> to vector<1x64xf32>
    %cst_25 = arith.constant dense<0.000000e+00> : vector<1x1024xf32>
    %28 = tpu.matmul %27, %25, %cst_25 {dimension_numbers = #tpu.dot_dimension_numbers<[1], [0], [0], [1], [0, 0, 1, 1], [], []>} : vector<1x64xf32>, vector<64x1024xf32>, vector<1x1024xf32> -> vector<1x1024xf32>
    %c0_26 = arith.constant 0 : index
    %c0_27 = arith.constant 0 : index
    %29 = vector.load %arg10[%c0_26, %c0_27] : memref<1x1xf32, #tpu.memory_space<vmem>>, vector<1x1xf32>
    %30 = vector.broadcast %29 : vector<1x1xf32> to vector<1x1024xf32>
    %31 = arith.addf %28, %30 : vector<1x1024xf32>
    %c0_28 = arith.constant 0 : index
    %c0_29 = arith.constant 0 : index
    %c0_30 = arith.constant 0 : index
    %32 = vector.load %arg11[%c0_28, %c0_29, %c0_30] : memref<1x1x1024xf32, #tpu.memory_space<vmem>>, vector<1x1x1024xf32>
    %33 = vector.shape_cast %32 : vector<1x1x1024xf32> to vector<1x1024xf32>
    %34 = vector.shape_cast %31 : vector<1x1024xf32> to vector<1x1x1024xf32>
    tpu.vector_store %arg11[%c0_28, %c0_29, %c0_30], %34 {strides = array<i32>} : memref<1x1x1024xf32, #tpu.memory_space<vmem>>, vector<1x1x1024xf32>,
    return
  }
  func.func @transform_0(%arg0: i32, %arg1: i32) -> (i32, i32, i32) {
    %c0_i32 = arith.constant 0 : i32
    %c0_i32_0 = arith.constant 0 : i32
    return %arg0, %c0_i32, %arg1 : i32, i32, i32
  }
  func.func @transform_1(%arg0: i32, %arg1: i32) -> (i32, i32, i32) {
    %c0_i32 = arith.constant 0 : i32
    %c0_i32_0 = arith.constant 0 : i32
    %c0_i32_1 = arith.constant 0 : i32
    return %arg0, %c0_i32, %c0_i32_0 : i32, i32, i32
  }
  func.func @transform_2(%arg0: i32, %arg1: i32) -> (i32, i32, i32) {
    %c0_i32 = arith.constant 0 : i32
    %c0_i32_0 = arith.constant 0 : i32
    %c0_i32_1 = arith.constant 0 : i32
    return %arg0, %c0_i32, %c0_i32_0 : i32, i32, i32
  }
  func.func @transform_3(%arg0: i32, %arg1: i32) -> (i32, i32, i32) {
    %c0_i32 = arith.constant 0 : i32
    %c0_i32_0 = arith.constant 0 : i32
    %c0_i32_1 = arith.constant 0 : i32
    return %arg0, %c0_i32, %c0_i32_0 : i32, i32, i32
  }
  func.func @transform_4(%arg0: i32, %arg1: i32) -> (i32, i32, i32) {
    %c0_i32 = arith.constant 0 : i32
    %c0_i32_0 = arith.constant 0 : i32
    %c0_i32_1 = arith.constant 0 : i32
    return %arg0, %c0_i32, %c0_i32_0 : i32, i32, i32
  }
  func.func @transform_5(%arg0: i32, %arg1: i32) -> (i32, i32) {
    %c0_i32 = arith.constant 0 : i32
    %c0_i32_0 = arith.constant 0 : i32
    %c0_i32_1 = arith.constant 0 : i32
    return %c0_i32, %c0_i32_0 : i32, i32
  }
  func.func @transform_6(%arg0: i32, %arg1: i32) -> (i32, i32) {
    %c0_i32 = arith.constant 0 : i32
    %c0_i32_0 = arith.constant 0 : i32
    %c0_i32_1 = arith.constant 0 : i32
    return %c0_i32, %c0_i32_0 : i32, i32
  }
  func.func @transform_7(%arg0: i32, %arg1: i32) -> (i32, i32) {
    %c0_i32 = arith.constant 0 : i32
    %c0_i32_0 = arith.constant 0 : i32
    %c0_i32_1 = arith.constant 0 : i32
    return %c0_i32, %c0_i32_0 : i32, i32
  }
  func.func @transform_8(%arg0: i32, %arg1: i32) -> (i32, i32) {
    %c0_i32 = arith.constant 0 : i32
    %c0_i32_0 = arith.constant 0 : i32
    %c0_i32_1 = arith.constant 0 : i32
    return %c0_i32, %c0_i32_0 : i32, i32
  }
  func.func @transform_9(%arg0: i32, %arg1: i32) -> (i32, i32, i32) {
    %c0_i32 = arith.constant 0 : i32
    %c0_i32_0 = arith.constant 0 : i32
    return %arg0, %c0_i32, %arg1 : i32, i32, i32
  }
}

</mosaic_0001>

<llo_original>
// kernel: tpu_custom_call.1
$region0: #{tpu_custom_call.1}
  #allocation0 [shape = 'u32[]', space=smem, size = 0x4, offset = 0x4, fixed_abs, tag = 'smem constant byte address 0x4 - core index']
  #allocation1 [shape = 'u32[144,128]{1,0:T(1,128)}', space=vmem, size = 0x12000, scoped, tag = 'internal scratch']
  #allocation2 [shape = 'f32[1,1]{1,0:T(1,128)S(1)}', space=vmem, size = 0x200, scoped, tag = 'scoped memory for tpu_custom_call.1']
  %s0 = inlined_call_operand.vmem [shape: f32[2,8,1024], index: 0, kind: input, shape index: {}]
  %s1 = inlined_call_operand.vmem [shape: f32[2,64,8], index: 1, kind: input, shape index: {}]
  %s2 = inlined_call_operand.vmem [shape: f32[2,64,64], index: 2, kind: input, shape index: {}]
  %s3 = inlined_call_operand.hbm [shape: f32[2,64,64], index: 3, kind: input, shape index: {}]
  %s4 = inlined_call_operand.vmem [shape: f32[2,1,64], index: 4, kind: input, shape index: {}]
  %s5 = inlined_call_operand.vmem [shape: f32[64,1], index: 5, kind: input, shape index: {}]
  %s6 = inlined_call_operand.vmem [shape: f32[64,1], index: 6, kind: input, shape index: {}]
  %s7 = inlined_call_operand.vmem [shape: f32[64,1], index: 7, kind: input, shape index: {}]
  %s8 = inlined_call_operand.<no memory space> [shape: f32[1,1], index: 8, kind: input, shape index: {}]
  %s9 = inlined_call_operand.hbm [shape: f32[2,1,1024], index: 9, kind: output, shape index: {}]
  %s10 = sld [smem:[#allocation0]]
  $region73: #{tpu_custom_call.1} parent=0
    _
  %s12 = ssub.s32 1, %s10
  %s13 = scalar_select 0, %s12, %s10
  %v14 = vstv %s8
  %15 = vst [vmem:[#allocation2] sm:$0x1] %v14
  $region1: #{tpu_custom_call.1} parent=0
    #allocation3 [shape = 'u8[65536]{0}', space=vmem, size = 0x10000, scoped, tag = 'input window, operand 3']
    #allocation4 [shape = 's32[2]{0}', space=sflag, size = 0x8, scoped, tag = 'scoped memory for tpu_custom_call.1']
    #allocation5 [shape = 's32[2]{0}', space=sflag, size = 0x8, scoped, tag = 'scoped memory for tpu_custom_call.1']
    #allocation6 [shape = 'u8[8192]{0}', space=vmem, size = 0x2000, scoped, tag = 'output window, operand 0']
    %16 = vsyncpa [#allocation4], 0
    %s17 = scalar_lea.sflag [#allocation4], 1
    %18 = vsyncpa %s17, 0
    %19 = vsyncpa [#allocation5], 0
    %s20 = scalar_lea.sflag [#allocation5], 1
    %21 = vsyncpa %s20, 0
    loop: start=0, step=1, limit=4
    $region2: #{tpu_custom_call.1} parent=1 // loop_pre_header
      _
    $region3: #{tpu_custom_call.1} parent=1 // loop_header
      %s23 = sphi 0, %s27
      %p24 = scmp.ge.s32.totalorder %s23, 4
      %s30 = sphi 0, %s42
      %s31 = sphi 0, %s38
      %s32 = sphi 0, %s30
      %s33 = sphi 0, %s31
      %s34 = sphi 0, %s32
      %s35 = sphi 0, %s33
      %s47 = sphi 0, %s49
      %s50 = sphi 0, %s47
      %s51 = sphi 0, %s50
      %s67 = sphi 0, %s51
      %s73 = sphi 0, %s75
      %s76 = sphi 0, %s73
      %s77 = sphi 0, %s76
      %s93 = sphi 0, %s77
      %s99 = sphi 0, %s101
      %s102 = sphi 0, %s99
      %s103 = sphi 0, %s102
      %s119 = sphi 0, %s103
      %s125 = sphi 0, %s127
      %s128 = sphi 0, %s125
      %s129 = sphi 0, %s128
      %s145 = sphi 0, %s129
      %s151 = sphi 0, %s153
      %s154 = sphi 0, %s151
      %s155 = sphi 0, %s154
      %s171 = sphi 0, %s155
      %s175 = sphi 0, %s175
      %s177 = sphi 0, %s175
      %s178 = sphi 0, %s177
      %s192 = sphi 0, %s178
      %s196 = sphi 0, %s196
      %s198 = sphi 0, %s196
      %s199 = sphi 0, %s198
      %s213 = sphi 0, %s199
      %s217 = sphi 0, %s217
      %s219 = sphi 0, %s217
      %s220 = sphi 0, %s219
      %s234 = sphi 0, %s220
      %s238 = sphi 0, %s238
      %s240 = sphi 0, %s238
      %s241 = sphi 0, %s240
      %s255 = sphi 0, %s241
      %s263 = sphi 0, %s265
      %s266 = sphi 0, %s263
      %s267 = sphi 0, %s266
      %s283 = sphi 0, %s267
    $region4: #{tpu_custom_call.1} parent=1 // loop_header_branch
      %26 = sbr.rel (%p24) target = $region8
    $region5: #{tpu_custom_call.1} parent=1 // loop_body
      %s28 = ssub.s32 %s23, 1
      %s29 = ssub.s32 %s23, 2
      %s36 = sadd.s32 1, %s31
      %p37 = scmp.ge.s32.totalorder %s36, 1
      %s38 = scalar_select %p37, 0, %s36
      %s39 = sadd.s32 1, %s30
      %s40 = scalar_select %p37, %s39, %s30
      %p41 = scmp.ge.s32.totalorder %s40, 2
      %s42 = scalar_select %p41, 0, %s40
      %s43 = ssub.s32 %s30, %s42
      %s44 = ssub.s32 %s31, %s38
      %s45 = sor.u32 %s43, %s44
      %p46 = scmp.eq.s32.totalorder %s45, 0
      %s48 = sadd.s32 %s47, 1
      %s49 = scalar_select %p46, %s47, %s48
      %p52 = pneg %p46
      %p53 = scmp.eq.s32.totalorder %s23, 1
      %p54 = por %p52, %p53
      %p55 = scmp.ne.s32.totalorder %s47, %s50
      %p56 = scmp.eq.s32.totalorder %s23, 0
      %p57 = por %p55, %p56
      %p58 = scmp.ne.s32.totalorder %s47, %s50
      %p59 = scmp.eq.s32.totalorder %s28, 1
      %p60 = por %p58, %p59
      %p61 = scmp.ne.s32.totalorder %s50, %s51
      %p62 = scmp.eq.s32.totalorder %s28, 0
      %p63 = por %p61, %p62
      %p64 = scmp.ne.s32.totalorder %s50, %s51
      %p65 = scmp.eq.s32.totalorder %s29, 1
      %p66 = por %p64, %p65
      %p68 = scmp.ne.s32.totalorder %s51, %s67
      %p69 = scmp.eq.s32.totalorder %s29, 0
      %p70 = por %p68, %p69
      %s71 = ssub.s32 %s30, %s42
      %p72 = scmp.eq.s32.totalorder %s71, 0
      %s74 = sadd.s32 %s73, 1
      %s75 = scalar_select %p72, %s73, %s74
      %p78 = pneg %p72
      %p79 = scmp.eq.s32.totalorder %s23, 1
      %p80 = por %p78, %p79
      %p81 = scmp.ne.s32.totalorder %s73, %s76
      %p82 = scmp.eq.s32.totalorder %s23, 0
      %p83 = por %p81, %p82
      %p84 = scmp.ne.s32.totalorder %s73, %s76
      %p85 = scmp.eq.s32.totalorder %s28, 1
      %p86 = por %p84, %p85
      %p87 = scmp.ne.s32.totalorder %s76, %s77
      %p88 = scmp.eq.s32.totalorder %s28, 0
      %p89 = por %p87, %p88
      %p90 = scmp.ne.s32.totalorder %s76, %s77
      %p91 = scmp.eq.s32.totalorder %s29, 1
      %p92 = por %p90, %p91
      %p94 = scmp.ne.s32.totalorder %s77, %s93
      %p95 = scmp.eq.s32.totalorder %s29, 0
      %p96 = por %p94, %p95
      %s97 = ssub.s32 %s30, %s42
      %p98 = scmp.eq.s32.totalorder %s97, 0
      %s100 = sadd.s32 %s99, 1
      %s101 = scalar_select %p98, %s99, %s100
      %p104 = pneg %p98
      %p105 = scmp.eq.s32.totalorder %s23, 1
      %p106 = por %p104, %p105
      %p107 = scmp.ne.s32.totalorder %s99, %s102
      %p108 = scmp.eq.s32.totalorder %s23, 0
      %p109 = por %p107, %p108
      %p110 = scmp.ne.s32.totalorder %s99, %s102
      %p111 = scmp.eq.s32.totalorder %s28, 1
      %p112 = por %p110, %p111
      %p113 = scmp.ne.s32.totalorder %s102, %s103
      %p114 = scmp.eq.s32.totalorder %s28, 0
      %p115 = por %p113, %p114
      %p116 = scmp.ne.s32.totalorder %s102, %s103
      %p117 = scmp.eq.s32.totalorder %s29, 1
      %p118 = por %p116, %p117
      %p120 = scmp.ne.s32.totalorder %s103, %s119
      %p121 = scmp.eq.s32.totalorder %s29, 0
      %p122 = por %p120, %p121
      %s123 = ssub.s32 %s30, %s42
      %p124 = scmp.eq.s32.totalorder %s123, 0
      %s126 = sadd.s32 %s125, 1
      %s127 = scalar_select %p124, %s125, %s126
      %p130 = pneg %p124
      %p131 = scmp.eq.s32.totalorder %s23, 1
      %p132 = por %p130, %p131
      %p133 = scmp.ne.s32.totalorder %s125, %s128
      %p134 = scmp.eq.s32.totalorder %s23, 0
      %p135 = por %p133, %p134
      %p136 = scmp.ne.s32.totalorder %s125, %s128
      %p137 = scmp.eq.s32.totalorder %s28, 1
      %p138 = por %p136, %p137
      %p139 = scmp.ne.s32.totalorder %s128, %s129
      %p140 = scmp.eq.s32.totalorder %s28, 0
      %p141 = por %p139, %p140
      %p142 = scmp.ne.s32.totalorder %s128, %s129
      %p143 = scmp.eq.s32.totalorder %s29, 1
      %p144 = por %p142, %p143
      %p146 = scmp.ne.s32.totalorder %s129, %s145
      %p147 = scmp.eq.s32.totalorder %s29, 0
      %p148 = por %p146, %p147
      %s149 = ssub.s32 %s30, %s42
      %p150 = scmp.eq.s32.totalorder %s149, 0
      %s152 = sadd.s32 %s151, 1
      %s153 = scalar_select %p150, %s151, %s152
      %p156 = pneg %p150
      %p157 = scmp.eq.s32.totalorder %s23, 1
      %p158 = por %p156, %p157
      %p159 = scmp.ne.s32.totalorder %s151, %s154
      %p160 = scmp.eq.s32.totalorder %s23, 0
      %p161 = por %p159, %p160
      %p162 = scmp.ne.s32.totalorder %s151, %s154
      %p163 = scmp.eq.s32.totalorder %s28, 1
      %p164 = por %p162, %p163
      %p165 = scmp.ne.s32.totalorder %s154, %s155
      %p166 = scmp.eq.s32.totalorder %s28, 0
      %p167 = por %p165, %p166
      %p168 = scmp.ne.s32.totalorder %s154, %s155
      %p169 = scmp.eq.s32.totalorder %s29, 1
      %p170 = por %p168, %p169
      %p172 = scmp.ne.s32.totalorder %s155, %s171
      %p173 = scmp.eq.s32.totalorder %s29, 0
      %p174 = por %p172, %p173
      %s176 = sadd.s32 %s175, 1
      %p179 = scmp.eq.s32.totalorder %s23, 1
      %p180 = scmp.ne.s32.totalorder %s175, %s177
      %p181 = scmp.eq.s32.totalorder %s23, 0
      %p182 = por %p180, %p181
      %p183 = scmp.ne.s32.totalorder %s175, %s177
      %p184 = scmp.eq.s32.totalorder %s28, 1
      %p185 = por %p183, %p184
      %p186 = scmp.ne.s32.totalorder %s177, %s178
      %p187 = scmp.eq.s32.totalorder %s28, 0
      %p188 = por %p186, %p187
      %p189 = scmp.ne.s32.totalorder %s177, %s178
      %p190 = scmp.eq.s32.totalorder %s29, 1
      %p191 = por %p189, %p190
      %p193 = scmp.ne.s32.totalorder %s178, %s192
      %p194 = scmp.eq.s32.totalorder %s29, 0
      %p195 = por %p193, %p194
      %s197 = sadd.s32 %s196, 1
      %p200 = scmp.eq.s32.totalorder %s23, 1
      %p201 = scmp.ne.s32.totalorder %s196, %s198
      %p202 = scmp.eq.s32.totalorder %s23, 0
      %p203 = por %p201, %p202
      %p204 = scmp.ne.s32.totalorder %s196, %s198
      %p205 = scmp.eq.s32.totalorder %s28, 1
      %p206 = por %p204, %p205
      %p207 = scmp.ne.s32.totalorder %s198, %s199
      %p208 = scmp.eq.s32.totalorder %s28, 0
      %p209 = por %p207, %p208
      %p210 = scmp.ne.s32.totalorder %s198, %s199
      %p211 = scmp.eq.s32.totalorder %s29, 1
      %p212 = por %p210, %p211
      %p214 = scmp.ne.s32.totalorder %s199, %s213
      %p215 = scmp.eq.s32.totalorder %s29, 0
      %p216 = por %p214, %p215
      %s218 = sadd.s32 %s217, 1
      %p221 = scmp.eq.s32.totalorder %s23, 1
      %p222 = scmp.ne.s32.totalorder %s217, %s219
      %p223 = scmp.eq.s32.totalorder %s23, 0
      %p224 = por %p222, %p223
      %p225 = scmp.ne.s32.totalorder %s217, %s219
      %p226 = scmp.eq.s32.totalorder %s28, 1
      %p227 = por %p225, %p226
      %p228 = scmp.ne.s32.totalorder %s219, %s220
      %p229 = scmp.eq.s32.totalorder %s28, 0
      %p230 = por %p228, %p229
      %p231 = scmp.ne.s32.totalorder %s219, %s220
      %p232 = scmp.eq.s32.totalorder %s29, 1
      %p233 = por %p231, %p232
      %p235 = scmp.ne.s32.totalorder %s220, %s234
      %p236 = scmp.eq.s32.totalorder %s29, 0
      %p237 = por %p235, %p236
      %s239 = sadd.s32 %s238, 1
      %p242 = scmp.eq.s32.totalorder %s23, 1
      %p243 = scmp.ne.s32.totalorder %s238, %s240
      %p244 = scmp.eq.s32.totalorder %s23, 0
      %p245 = por %p243, %p244
      %p246 = scmp.ne.s32.totalorder %s238, %s240
      %p247 = scmp.eq.s32.totalorder %s28, 1
      %p248 = por %p246, %p247
      %p249 = scmp.ne.s32.totalorder %s240, %s241
      %p250 = scmp.eq.s32.totalorder %s28, 0
      %p251 = por %p249, %p250
      %p252 = scmp.ne.s32.totalorder %s240, %s241
      %p253 = scmp.eq.s32.totalorder %s29, 1
      %p254 = por %p252, %p253
      %p256 = scmp.ne.s32.totalorder %s241, %s255
      %p257 = scmp.eq.s32.totalorder %s29, 0
      %p258 = por %p256, %p257
      %s259 = ssub.s32 %s30, %s42
      %s260 = ssub.s32 %s31, %s38
      %s261 = sor.u32 %s259, %s260
      %p262 = scmp.eq.s32.totalorder %s261, 0
      %s264 = sadd.s32 %s263, 1
      %s265 = scalar_select %p262, %s263, %s264
      %p268 = pneg %p262
      %p269 = scmp.eq.s32.totalorder %s23, 1
      %p270 = por %p268, %p269
      %p271 = scmp.ne.s32.totalorder %s263, %s266
      %p272 = scmp.eq.s32.totalorder %s23, 0
      %p273 = por %p271, %p272
      %p274 = scmp.ne.s32.totalorder %s263, %s266
      %p275 = scmp.eq.s32.totalorder %s28, 1
      %p276 = por %p274, %p275
      %p277 = scmp.ne.s32.totalorder %s266, %s267
      %p278 = scmp.eq.s32.totalorder %s28, 0
      %p279 = por %p277, %p278
      %p280 = scmp.ne.s32.totalorder %s266, %s267
      %p281 = scmp.eq.s32.totalorder %s29, 1
      %p282 = por %p280, %p281
      %p284 = scmp.ne.s32.totalorder %s267, %s283
      %p285 = scmp.eq.s32.totalorder %s29, 0
      %p286 = por %p284, %p285
      %p287 = scmp.le.s32.totalorder 1, %s23
      %p288 = scmp.lt.s32.totalorder %s23, 3
      %p289 = pnand %p287, %p288
      %p290 = pneg %p289
      // Predicated region
      $region9: #{tpu_custom_call.1} parent=5 // pred_check
        _
      $region10: #{tpu_custom_call.1} parent=5 // pred_check_branch
        %292 = sbr.rel (%p289) target = $region12
      $region11: #{tpu_custom_call.1} parent=5 // pred_region
        %s293 = ssub.s32 %s23, 1
        // Predicated region
        $region13: #{tpu_custom_call.1} parent=11 // pred_check
          %p294 = pneg %p188
        $region14: #{tpu_custom_call.1} parent=11 // pred_check_branch
          %296 = sbr.rel (%p294) target = $region16
        $region15: #{tpu_custom_call.1} parent=11 // pred_region
          _
        $region16: #{tpu_custom_call.1} parent=11 // pred_fallthru
          _
        // Predicated region
        $region17: #{tpu_custom_call.1} parent=11 // pred_check
          %p297 = pneg %p209
        $region18: #{tpu_custom_call.1} parent=11 // pred_check_branch
          %299 = sbr.rel (%p297) target = $region20
        $region19: #{tpu_custom_call.1} parent=11 // pred_region
          _
        $region20: #{tpu_custom_call.1} parent=11 // pred_fallthru
          _
        // Predicated region
        $region21: #{tpu_custom_call.1} parent=11 // pred_check
          %p300 = pneg %p230
        $region22: #{tpu_custom_call.1} parent=11 // pred_check_branch
          %302 = sbr.rel (%p300) target = $region24
        $region23: #{tpu_custom_call.1} parent=11 // pred_region
          _
        $region24: #{tpu_custom_call.1} parent=11 // pred_fallthru
          _
        // Predicated region
        $region25: #{tpu_custom_call.1} parent=11 // pred_check
          %p303 = pneg %p251
        $region26: #{tpu_custom_call.1} parent=11 // pred_check_branch
          %305 = sbr.rel (%p303) target = $region28
        $region27: #{tpu_custom_call.1} parent=11 // pred_region
          _
        $region28: #{tpu_custom_call.1} parent=11 // pred_fallthru
          _
      $region12: #{tpu_custom_call.1} parent=5 // pred_fallthru
        _
      %p306 = scmp.lt.s32.totalorder %s23, 2
      // Predicated region
      $region29: #{tpu_custom_call.1} parent=5 // pred_check
        %p307 = pneg %p306
      $region30: #{tpu_custom_call.1} parent=5 // pred_check_branch
        %309 = sbr.rel (%p307) target = $region32
      $region31: #{tpu_custom_call.1} parent=5 // pred_region
        // Predicated region
        $region33: #{tpu_custom_call.1} parent=31 // pred_check
          %p310 = pneg %p57
        $region34: #{tpu_custom_call.1} parent=31 // pred_check_branch
          %312 = sbr.rel (%p310) target = $region36
        $region35: #{tpu_custom_call.1} parent=31 // pred_region
          %s313 = smul.u32 8, %s31
          %p314 = scmp.lt.s32.totalorder %s30, 1
          %s315 = scalar_select %p314, %s30, 1
          %p316 = scmp.lt.s32.totalorder %s313, 7
          %s317 = scalar_select %p316, %s313, 7
          %s318 = smul.addr %s315, 8
          %s319 = sadd.s32 %s317, %s318
          %s320 = smul.addr %s319, 8
          %s321 = scalar_lea.vmem %s0, %s320
          %s322 = smul.u32 8, %s31
        $region36: #{tpu_custom_call.1} parent=31 // pred_fallthru
          _
        // Predicated region
        $region37: #{tpu_custom_call.1} parent=31 // pred_check
          %p323 = pneg %p83
        $region38: #{tpu_custom_call.1} parent=31 // pred_check_branch
          %325 = sbr.rel (%p323) target = $region40
        $region39: #{tpu_custom_call.1} parent=31 // pred_region
          %p326 = scmp.lt.s32.totalorder %s30, 1
          %s327 = scalar_select %p326, %s30, 1
          %s328 = smul.addr %s327, 8
          %s329 = smul.addr %s328, 8
          %s330 = scalar_lea.vmem %s1, %s329
        $region40: #{tpu_custom_call.1} parent=31 // pred_fallthru
          _
        // Predicated region
        $region41: #{tpu_custom_call.1} parent=31 // pred_check
          %p331 = pneg %p109
        $region42: #{tpu_custom_call.1} parent=31 // pred_check_branch
          %333 = sbr.rel (%p331) target = $region44
        $region43: #{tpu_custom_call.1} parent=31 // pred_region
          %p334 = scmp.lt.s32.totalorder %s30, 1
          %s335 = scalar_select %p334, %s30, 1
          %s336 = smul.addr %s335, 8
          %s337 = smul.addr %s336, 8
          %s338 = scalar_lea.vmem %s2, %s337
        $region44: #{tpu_custom_call.1} parent=31 // pred_fallthru
          _
        // Predicated region
        $region45: #{tpu_custom_call.1} parent=31 // pred_check
          %p339 = pneg %p135
        $region46: #{tpu_custom_call.1} parent=31 // pred_check_branch
          %341 = sbr.rel (%p339) target = $region48
        $region47: #{tpu_custom_call.1} parent=31 // pred_region
          %s342 = sand.u32 %s125, 1
          %s343 = scalar_lea.sflag [#allocation4], %s342
          %s344 = sand.u32 %s125, 1
          %s345 = smul.addr %s344, 64
          %s346 = scalar_lea.vmem [#allocation3], %s345
          %s348 = ssub.s32 1024, 1024
          %349 = vsyncadd %s343, %s348
          %s350 = smul.addr %s30, 8
          %s351 = smul.addr %s350, 128
          %s352 = scalar_lea.hbm %s3, %s351
          %s353 = sshll.u32 %s346, 4
          %s354 = int_to_ptr.vmem [resolvable:$true] %s353
          %359 = dma.hbm_to_vmem [thread:$0]  %s352, 1024, %s354, %s343, 128, 128, 8
        $region48: #{tpu_custom_call.1} parent=31 // pred_fallthru
          _
        // Predicated region
        $region49: #{tpu_custom_call.1} parent=31 // pred_check
          %p360 = pneg %p161
        $region50: #{tpu_custom_call.1} parent=31 // pred_check_branch
          %362 = sbr.rel (%p360) target = $region52
        $region51: #{tpu_custom_call.1} parent=31 // pred_region
          %p363 = scmp.lt.s32.totalorder %s30, 1
          %s364 = scalar_select %p363, %s30, 1
          %s365 = scalar_lea.vmem %s4, %s364
        $region52: #{tpu_custom_call.1} parent=31 // pred_fallthru
          _
      $region32: #{tpu_custom_call.1} parent=5 // pred_fallthru
        _
      %p366 = scmp.le.s32.totalorder 1, %s23
      %p367 = scmp.lt.s32.totalorder %s23, 3
      %p368 = pnand %p366, %p367
      %p369 = pneg %p368
      // Predicated region
      $region53: #{tpu_custom_call.1} parent=5 // pred_check
        _
      $region54: #{tpu_custom_call.1} parent=5 // pred_check_branch
        %371 = sbr.rel (%p368) target = $region56
      $region55: #{tpu_custom_call.1} parent=5 // pred_region
        %s372 = ssub.s32 %s23, 1
        %s373 = sand.u32 %s128, 1
        %s374 = scalar_lea.sflag [#allocation4], %s373
        %s375 = sand.u32 %s128, 1
        %s376 = smul.addr %s375, 64
        %s377 = scalar_lea.vmem [#allocation3], %s376
        // Predicated region
        $region57: #{tpu_custom_call.1} parent=55 // pred_check
          %p378 = pneg %p141
        $region58: #{tpu_custom_call.1} parent=55 // pred_check_branch
          %380 = sbr.rel (%p378) target = $region60
        $region59: #{tpu_custom_call.1} parent=55 // pred_region
          %381 = dma.done %s374, 1024
        $region60: #{tpu_custom_call.1} parent=55 // pred_fallthru
          _
        %s382 = smul.u32 8, %s33
        %p383 = scmp.lt.s32.totalorder %s32, 1
        %s384 = scalar_select %p383, %s32, 1
        %p385 = scmp.lt.s32.totalorder %s382, 7
        %s386 = scalar_select %p385, %s382, 7
        %s387 = smul.addr %s384, 8
        %s388 = sadd.s32 %s386, %s387
        %s389 = smul.addr %s388, 8
        %s390 = scalar_lea.vmem %s0, %s389
        %p391 = pneg %p63
        %p392 = pneg %p60
        %p393 = scmp.lt.s32.totalorder %s32, 1
        %s394 = scalar_select %p393, %s32, 1
        %s395 = smul.addr %s394, 8
        %s396 = smul.addr %s395, 8
        %s397 = scalar_lea.vmem %s1, %s396
        %p398 = pneg %p89
        %p399 = pneg %p86
        %p400 = scmp.lt.s32.totalorder %s32, 1
        %s401 = scalar_select %p400, %s32, 1
        %s402 = smul.addr %s401, 8
        %s403 = smul.addr %s402, 8
        %s404 = scalar_lea.vmem %s2, %s403
        %p405 = pneg %p115
        %p406 = pneg %p112
        %s407 = sand.u32 %s128, 1
        %s408 = scalar_lea.sflag [#allocation4], %s407
        %s409 = sand.u32 %s128, 1
        %s410 = smul.addr %s409, 64
        %s411 = scalar_lea.vmem [#allocation3], %s410
        %p412 = pneg %p141
        %p413 = pneg %p138
        %p414 = scmp.lt.s32.totalorder %s32, 1
        %s415 = scalar_select %p414, %s32, 1
        %s416 = scalar_lea.vmem %s4, %s415
        %p417 = pneg %p167
        %p418 = pneg %p164
        %p419 = pneg %p188
        %p420 = pneg %p185
        %p421 = pneg %p209
        %p422 = pneg %p206
        %p423 = pneg %p230
        %p424 = pneg %p227
        %p425 = pneg %p251
        %p426 = pneg %p248
        %p427 = pneg %p279
        %p428 = pneg %p276
        %s429 = sand.u32 %s266, 1
        %s430 = scalar_lea.sflag [#allocation5], %s429
        %s431 = sand.u32 %s266, 1
        %s432 = smul.addr %s431, 8
        %s433 = scalar_lea.vmem [#allocation6], %s432
        %s434 = smul.u32 8, %s33
        %p435 = scmp.lt.s32.totalorder %s32, 1
        %s436 = scalar_select %p435, %s32, 1
        %p437 = scmp.lt.s32.totalorder %s434, 7
        %s438 = scalar_select %p437, %s434, 7
        %s439 = smul.addr %s436, 8
        %s440 = sadd.s32 %s438, %s439
        %s441 = smul.addr %s440, 8
        %s442 = scalar_lea.vmem %s0, %s441
        %s443 = smul.u32 8, %s33
        %p444 = scmp.lt.s32.totalorder %s32, 1
        %s445 = scalar_select %p444, %s32, 1
        %s446 = smul.addr %s445, 8
        %s447 = smul.addr %s446, 8
        %s448 = scalar_lea.vmem %s1, %s447
        %p449 = scmp.lt.s32.totalorder %s32, 1
        %s450 = scalar_select %p449, %s32, 1
        %s451 = smul.addr %s450, 8
        %s452 = smul.addr %s451, 8
        %s453 = scalar_lea.vmem %s2, %s452
        %p454 = scmp.lt.s32.totalorder %s32, 1
        %s455 = scalar_select %p454, %s32, 1
        %s456 = scalar_lea.vmem %s4, %s455
        %s457 = smul.u32 8, %s33
        %v458 = vld [vmem:[%s442] sm:$0xff]
        %v459 = vld [vmem:[%s442 + $0x8] sm:$0xff]
        %v460 = vld [vmem:[%s442 + $0x10] sm:$0xff]
        %v461 = vld [vmem:[%s442 + $0x18] sm:$0xff]
        %v462 = vld [vmem:[%s442 + $0x20] sm:$0xff]
        %v463 = vld [vmem:[%s442 + $0x28] sm:$0xff]
        %v464 = vld [vmem:[%s442 + $0x30] sm:$0xff]
        %v465 = vld [vmem:[%s442 + $0x38] sm:$0xff]
        %v466 = vld [vmem:[%s448] sm:$0xff]
        %v467 = vld [vmem:[%s448 + $0x8] sm:$0xff]
        %v468 = vld [vmem:[%s448 + $0x10] sm:$0xff]
        %v469 = vld [vmem:[%s448 + $0x18] sm:$0xff]
        %v470 = vld [vmem:[%s448 + $0x20] sm:$0xff]
        %v471 = vld [vmem:[%s448 + $0x28] sm:$0xff]
        %v472 = vld [vmem:[%s448 + $0x30] sm:$0xff]
        %v473 = vld [vmem:[%s448 + $0x38] sm:$0xff]
        %v474 = vld [vmem:[%s5] sm:$0xff]
        %v475 = vld [vmem:[%s5 + $0x8] sm:$0xff]
        %v476 = vld [vmem:[%s5 + $0x10] sm:$0xff]
        %v477 = vld [vmem:[%s5 + $0x18] sm:$0xff]
        %v478 = vld [vmem:[%s5 + $0x20] sm:$0xff]
        %v479 = vld [vmem:[%s5 + $0x28] sm:$0xff]
        %v480 = vld [vmem:[%s5 + $0x30] sm:$0xff]
        %v481 = vld [vmem:[%s5 + $0x38] sm:$0xff]
        %483 = vset.pattern.permute.xlu0 0
        %484 = vperm.xlu0 %483, %v474
        %v485 = vpop.permute.xlu0 %484
        %488 = vset.pattern.permute.xlu0 0
        %489 = vperm.xlu0 %488, %v475
        %v490 = vpop.permute.xlu0 %489
        %493 = vset.pattern.permute.xlu0 0
        %494 = vperm.xlu0 %493, %v476
        %v495 = vpop.permute.xlu0 %494
        %498 = vset.pattern.permute.xlu0 0
        %499 = vperm.xlu0 %498, %v477
        %v500 = vpop.permute.xlu0 %499
        %503 = vset.pattern.permute.xlu0 0
        %504 = vperm.xlu0 %503, %v478
        %v505 = vpop.permute.xlu0 %504
        %508 = vset.pattern.permute.xlu0 0
        %509 = vperm.xlu0 %508, %v479
        %v510 = vpop.permute.xlu0 %509
        %513 = vset.pattern.permute.xlu0 0
        %514 = vperm.xlu0 %513, %v480
        %v515 = vpop.permute.xlu0 %514
        %518 = vset.pattern.permute.xlu0 0
        %519 = vperm.xlu0 %518, %v481
        %v520 = vpop.permute.xlu0 %519
        %vm522 = vcmask 64512
        %v524 = vsel %vm522, %v466, 0
        %v527 = vsel %vm522, %v467, 0
        %v530 = vsel %vm522, %v468, 0
        %v533 = vsel %vm522, %v469, 0
        %v536 = vsel %vm522, %v470, 0
        %v539 = vsel %vm522, %v471, 0
        %v542 = vsel %vm522, %v472, 0
        %v545 = vsel %vm522, %v473, 0
        %547 = vmatprep.subr.mxu0 %v459
        %548 = vmatpush1.msra.mxu0 %v458
        %549 = vmatprep.subr.mxu0 0.0
        %550 = vmatpush1.msra.mxu0 0.0
        %551 = vmatprep.subr.mxu0 0.0
        %552 = vmatpush1.msra.mxu0 0.0
        %553 = vmatprep.subr.mxu0 0.0
        %554 = vmatpush1.msra.mxu0 0.0
        %555 = vmatprep.subr.mxu0 0.0
        %556 = vmatpush1.msra.mxu0 0.0
        %557 = vmatprep.subr.mxu0 0.0
        %558 = vmatpush1.msra.mxu0 0.0
        %559 = vmatprep.subr.mxu0 0.0
        %560 = vmatpush1.msra.mxu0 0.0
        %561 = vmatprep.subr.mxu0 0.0
        %562 = vmatpush1.msra.mxu0 0.0
        %563 = vmatprep.subr.mxu0 0.0
        %564 = vmatpush1.msra.mxu0 0.0
        %565 = vmatprep.subr.mxu0 0.0
        %566 = vmatpush1.msra.mxu0 0.0
        %567 = vmatprep.subr.mxu0 0.0
        %568 = vmatpush1.msra.mxu0 0.0
        %569 = vmatprep.subr.mxu0 0.0
        %570 = vmatpush1.msra.mxu0 0.0
        %571 = vmatprep.subr.mxu0 0.0
        %572 = vmatpush1.msra.mxu0 0.0
        %573 = vmatprep.subr.mxu0 0.0
        %574 = vmatpush1.msra.mxu0 0.0
        %575 = vmatprep.subr.mxu0 0.0
        %576 = vmatpush1.msra.mxu0 0.0
        %577 = vmatprep.subr.mxu0 0.0
        %578 = vmatpush1.msra.mxu0 0.0
        %579 = vmatprep.subr.mxu0 0.0
        %580 = vmatpush1.msra.mxu0 0.0
        %581 = vmatprep.subr.mxu0 0.0
        %582 = vmatpush1.msra.mxu0 0.0
        %583 = vmatprep.subr.mxu0 0.0
        %584 = vmatpush1.msra.mxu0 0.0
        %585 = vmatprep.subr.mxu0 0.0
        %586 = vmatpush1.msra.mxu0 0.0
        %587 = vmatprep.subr.mxu0 0.0
        %588 = vmatpush1.msra.mxu0 0.0
        %589 = vmatprep.subr.mxu0 0.0
        %590 = vmatpush1.msra.mxu0 0.0
        %591 = vmatprep.subr.mxu0 0.0
        %592 = vmatpush1.msra.mxu0 0.0
        %593 = vmatprep.subr.mxu0 0.0
        %594 = vmatpush1.msra.mxu0 0.0
        %595 = vmatprep.subr.mxu0 0.0
        %596 = vmatpush1.msra.mxu0 0.0
        %597 = vmatprep.subr.mxu0 0.0
        %598 = vmatpush1.msra.mxu0 0.0
        %599 = vmatprep.subr.mxu0 0.0
        %600 = vmatpush1.msra.mxu0 0.0
        %601 = vmatprep.subr.mxu0 0.0
        %602 = vmatpush1.msra.mxu0 0.0
        %603 = vmatprep.subr.mxu0 0.0
        %604 = vmatpush1.msra.mxu0 0.0
        %605 = vmatprep.subr.mxu0 0.0
        %606 = vmatpush1.msra.mxu0 0.0
        %607 = vmatprep.subr.mxu0 0.0
        %608 = vmatpush1.msra.mxu0 0.0
        %609 = vmatprep.subr.mxu0 0.0
        %610 = vmatpush1.msra.mxu0 0.0
        %611 = vmatprep.mubr.f32.mxu0 0.0
        %612 = vmatmul.mubr.f32.gmra.mrb[0].mxu0 %v524
        %v613 = vpop.f32.mrb[0].mxu0
        %v614 = vadd.f32 %v485, %v613
        %v615 = vpop.f32.mrb[0].mxu0
        %v616 = vadd.f32 %v485, %v615
        %617 = vmatprep.mubr.f32.mxu0 0.0
        %618 = vmatmul.mubr.f32.gmra.mrb[0].mxu0 %v527
        %v619 = vpop.f32.mrb[0].mxu0
        %v620 = vadd.f32 %v490, %v619
        %v621 = vpop.f32.mrb[0].mxu0
        %v622 = vadd.f32 %v490, %v621
        %623 = vmatprep.mubr.f32.mxu0 0.0
        %624 = vmatmul.mubr.f32.gmra.mrb[0].mxu0 %v530
        %v625 = vpop.f32.mrb[0].mxu0
        %v626 = vadd.f32 %v495, %v625
        %v627 = vpop.f32.mrb[0].mxu0
        %v628 = vadd.f32 %v495, %v627
        %629 = vmatprep.mubr.f32.mxu0 0.0
        %630 = vmatmul.mubr.f32.gmra.mrb[0].mxu0 %v533
        %v631 = vpop.f32.mrb[0].mxu0
        %v632 = vadd.f32 %v500, %v631
        %v633 = vpop.f32.mrb[0].mxu0
        %v634 = vadd.f32 %v500, %v633
        %635 = vmatprep.mubr.f32.mxu0 0.0
        %636 = vmatmul.mubr.f32.gmra.mrb[0].mxu0 %v536
        %v637 = vpop.f32.mrb[0].mxu0
        %v638 = vadd.f32 %v505, %v637
        %v639 = vpop.f32.mrb[0].mxu0
        %v640 = vadd.f32 %v505, %v639
        %641 = vmatprep.mubr.f32.mxu0 0.0
        %642 = vmatmul.mubr.f32.gmra.mrb[0].mxu0 %v539
        %v643 = vpop.f32.mrb[0].mxu0
        %v644 = vadd.f32 %v510, %v643
        %v645 = vpop.f32.mrb[0].mxu0
        %v646 = vadd.f32 %v510, %v645
        %647 = vmatprep.mubr.f32.mxu0 0.0
        %648 = vmatmul.mubr.f32.gmra.mrb[0].mxu0 %v542
        %v649 = vpop.f32.mrb[0].mxu0
        %v650 = vadd.f32 %v515, %v649
        %v651 = vpop.f32.mrb[0].mxu0
        %v652 = vadd.f32 %v515, %v651
        %653 = vmatprep.mubr.f32.mxu0 0.0
        %654 = vmatmul.mubr.f32.gmra.mrb[0].mxu0 %v545
        %v655 = vpop.f32.mrb[0].mxu0
        %v656 = vadd.f32 %v520, %v655
        %v657 = vpop.f32.mrb[0].mxu0
        %v658 = vadd.f32 %v520, %v657
        %659 = vdwg.mxu0
        %660 = vmatprep.subr.mxu0 %v461
        %661 = vmatpush1.msra.mxu0 %v460
        %662 = vmatprep.subr.mxu0 0.0
        %663 = vmatpush1.msra.mxu0 0.0
        %664 = vmatprep.subr.mxu0 0.0
        %665 = vmatpush1.msra.mxu0 0.0
        %666 = vmatprep.subr.mxu0 0.0
        %667 = vmatpush1.msra.mxu0 0.0
        %668 = vmatprep.subr.mxu0 0.0
        %669 = vmatpush1.msra.mxu0 0.0
        %670 = vmatprep.subr.mxu0 0.0
        %671 = vmatpush1.msra.mxu0 0.0
        %672 = vmatprep.subr.mxu0 0.0
        %673 = vmatpush1.msra.mxu0 0.0
        %674 = vmatprep.subr.mxu0 0.0
        %675 = vmatpush1.msra.mxu0 0.0
        %676 = vmatprep.subr.mxu0 0.0
        %677 = vmatpush1.msra.mxu0 0.0
        %678 = vmatprep.subr.mxu0 0.0
        %679 = vmatpush1.msra.mxu0 0.0
        %680 = vmatprep.subr.mxu0 0.0
        %681 = vmatpush1.msra.mxu0 0.0
        %682 = vmatprep.subr.mxu0 0.0
        %683 = vmatpush1.msra.mxu0 0.0
        %684 = vmatprep.subr.mxu0 0.0
        %685 = vmatpush1.msra.mxu0 0.0
        %686 = vmatprep.subr.mxu0 0.0
        %687 = vmatpush1.msra.mxu0 0.0
        %688 = vmatprep.subr.mxu0 0.0
        %689 = vmatpush1.msra.mxu0 0.0
        %690 = vmatprep.subr.mxu0 0.0
        %691 = vmatpush1.msra.mxu0 0.0
        %692 = vmatprep.subr.mxu0 0.0
        %693 = vmatpush1.msra.mxu0 0.0
        %694 = vmatprep.subr.mxu0 0.0
        %695 = vmatpush1.msra.mxu0 0.0
        %696 = vmatprep.subr.mxu0 0.0
        %697 = vmatpush1.msra.mxu0 0.0
        %698 = vmatprep.subr.mxu0 0.0
        %699 = vmatpush1.msra.mxu0 0.0
        %700 = vmatprep.subr.mxu0 0.0
        %701 = vmatpush1.msra.mxu0 0.0
        %702 = vmatprep.subr.mxu0 0.0
        %703 = vmatpush1.msra.mxu0 0.0
        %704 = vmatprep.subr.mxu0 0.0
        %705 = vmatpush1.msra.mxu0 0.0
        %706 = vmatprep.subr.mxu0 0.0
        %707 = vmatpush1.msra.mxu0 0.0
        %708 = vmatprep.subr.mxu0 0.0
        %709 = vmatpush1.msra.mxu0 0.0
        %710 = vmatprep.subr.mxu0 0.0
        %711 = vmatpush1.msra.mxu0 0.0
        %712 = vmatprep.subr.mxu0 0.0
        %713 = vmatpush1.msra.mxu0 0.0
        %714 = vmatprep.subr.mxu0 0.0
        %715 = vmatpush1.msra.mxu0 0.0
        %716 = vmatprep.subr.mxu0 0.0
        %717 = vmatpush1.msra.mxu0 0.0
        %718 = vmatprep.subr.mxu0 0.0
        %719 = vmatpush1.msra.mxu0 0.0
        %720 = vmatprep.subr.mxu0 0.0
        %721 = vmatpush1.msra.mxu0 0.0
        %722 = vmatprep.subr.mxu0 0.0
        %723 = vmatpush1.msra.mxu0 0.0
        %724 = vmatprep.mubr.f32.mxu0 0.0
        %725 = vmatmul.mubr.f32.gmra.mrb[0].mxu0 %v524
        %v726 = vpop.f32.mrb[0].mxu0
        %v727 = vadd.f32 %v485, %v726
        %v728 = vpop.f32.mrb[0].mxu0
        %v729 = vadd.f32 %v485, %v728
        %730 = vmatprep.mubr.f32.mxu0 0.0
        %731 = vmatmul.mubr.f32.gmra.mrb[0].mxu0 %v527
        %v732 = vpop.f32.mrb[0].mxu0
        %v733 = vadd.f32 %v490, %v732
        %v734 = vpop.f32.mrb[0].mxu0
        %v735 = vadd.f32 %v490, %v734
        %736 = vmatprep.mubr.f32.mxu0 0.0
        %737 = vmatmul.mubr.f32.gmra.mrb[0].mxu0 %v530
        %v738 = vpop.f32.mrb[0].mxu0
        %v739 = vadd.f32 %v495, %v738
        %v740 = vpop.f32.mrb[0].mxu0
        %v741 = vadd.f32 %v495, %v740
        %742 = vmatprep.mubr.f32.mxu0 0.0
        %743 = vmatmul.mubr.f32.gmra.mrb[0].mxu0 %v533
        %v744 = vpop.f32.mrb[0].mxu0
        %v745 = vadd.f32 %v500, %v744
        %v746 = vpop.f32.mrb[0].mxu0
        %v747 = vadd.f32 %v500, %v746
        %748 = vmatprep.mubr.f32.mxu0 0.0
        %749 = vmatmul.mubr.f32.gmra.mrb[0].mxu0 %v536
        %v750 = vpop.f32.mrb[0].mxu0
        %v751 = vadd.f32 %v505, %v750
        %v752 = vpop.f32.mrb[0].mxu0
        %v753 = vadd.f32 %v505, %v752
        %754 = vmatprep.mubr.f32.mxu0 0.0
        %755 = vmatmul.mubr.f32.gmra.mrb[0].mxu0 %v539
        %v756 = vpop.f32.mrb[0].mxu0
        %v757 = vadd.f32 %v510, %v756
        %v758 = vpop.f32.mrb[0].mxu0
        %v759 = vadd.f32 %v510, %v758
        %760 = vmatprep.mubr.f32.mxu0 0.0
        %761 = vmatmul.mubr.f32.gmra.mrb[0].mxu0 %v542
        %v762 = vpop.f32.mrb[0].mxu0
        %v763 = vadd.f32 %v515, %v762
        %v764 = vpop.f32.mrb[0].mxu0
        %v765 = vadd.f32 %v515, %v764
        %766 = vmatprep.mubr.f32.mxu0 0.0
        %767 = vmatmul.mubr.f32.gmra.mrb[0].mxu0 %v545
        %v768 = vpop.f32.mrb[0].mxu0
        %v769 = vadd.f32 %v520, %v768
        %v770 = vpop.f32.mrb[0].mxu0
        %v771 = vadd.f32 %v520, %v770
        %772 = vdwg.mxu0
        %773 = vmatprep.subr.mxu0 %v463
        %774 = vmatpush1.msra.mxu0 %v462
        %775 = vmatprep.subr.mxu0 0.0
        %776 = vmatpush1.msra.mxu0 0.0
        %777 = vmatprep.subr.mxu0 0.0
        %778 = vmatpush1.msra.mxu0 0.0
        %779 = vmatprep.subr.mxu0 0.0
        %780 = vmatpush1.msra.mxu0 0.0
        %781 = vmatprep.subr.mxu0 0.0
        %782 = vmatpush1.msra.mxu0 0.0
        %783 = vmatprep.subr.mxu0 0.0
        %784 = vmatpush1.msra.mxu0 0.0
        %785 = vmatprep.subr.mxu0 0.0
        %786 = vmatpush1.msra.mxu0 0.0
        %787 = vmatprep.subr.mxu0 0.0
        %788 = vmatpush1.msra.mxu0 0.0
        %789 = vmatprep.subr.mxu0 0.0
        %790 = vmatpush1.msra.mxu0 0.0
        %791 = vmatprep.subr.mxu0 0.0
        %792 = vmatpush1.msra.mxu0 0.0
        %793 = vmatprep.subr.mxu0 0.0
        %794 = vmatpush1.msra.mxu0 0.0
        %795 = vmatprep.subr.mxu0 0.0
        %796 = vmatpush1.msra.mxu0 0.0
        %797 = vmatprep.subr.mxu0 0.0
        %798 = vmatpush1.msra.mxu0 0.0
        %799 = vmatprep.subr.mxu0 0.0
        %800 = vmatpush1.msra.mxu0 0.0
        %801 = vmatprep.subr.mxu0 0.0
        %802 = vmatpush1.msra.mxu0 0.0
        %803 = vmatprep.subr.mxu0 0.0
        %804 = vmatpush1.msra.mxu0 0.0
        %805 = vmatprep.subr.mxu0 0.0
        %806 = vmatpush1.msra.mxu0 0.0
        %807 = vmatprep.subr.mxu0 0.0
        %808 = vmatpush1.msra.mxu0 0.0
        %809 = vmatprep.subr.mxu0 0.0
        %810 = vmatpush1.msra.mxu0 0.0
        %811 = vmatprep.subr.mxu0 0.0
        %812 = vmatpush1.msra.mxu0 0.0
        %813 = vmatprep.subr.mxu0 0.0
        %814 = vmatpush1.msra.mxu0 0.0
        %815 = vmatprep.subr.mxu0 0.0
        %816 = vmatpush1.msra.mxu0 0.0
        %817 = vmatprep.subr.mxu0 0.0
        %818 = vmatpush1.msra.mxu0 0.0
        %819 = vmatprep.subr.mxu0 0.0
        %820 = vmatpush1.msra.mxu0 0.0
        %821 = vmatprep.subr.mxu0 0.0
        %822 = vmatpush1.msra.mxu0 0.0
        %823 = vmatprep.subr.mxu0 0.0
        %824 = vmatpush1.msra.mxu0 0.0
        %825 = vmatprep.subr.mxu0 0.0
        %826 = vmatpush1.msra.mxu0 0.0
        %827 = vmatprep.subr.mxu0 0.0
        %828 = vmatpush1.msra.mxu0 0.0
        %829 = vmatprep.subr.mxu0 0.0
        %830 = vmatpush1.msra.mxu0 0.0
        %831 = vmatprep.subr.mxu0 0.0
        %832 = vmatpush1.msra.mxu0 0.0
        %833 = vmatprep.subr.mxu0 0.0
        %834 = vmatpush1.msra.mxu0 0.0
        %835 = vmatprep.subr.mxu0 0.0
        %836 = vmatpush1.msra.mxu0 0.0
        %837 = vmatprep.mubr.f32.mxu0 0.0
        %838 = vmatmul.mubr.f32.gmra.mrb[0].mxu0 %v524
        %v839 = vpop.f32.mrb[0].mxu0
        %v840 = vadd.f32 %v485, %v839
        %v841 = vpop.f32.mrb[0].mxu0
        %v842 = vadd.f32 %v485, %v841
        %843 = vmatprep.mubr.f32.mxu0 0.0
        %844 = vmatmul.mubr.f32.gmra.mrb[0].mxu0 %v527
        %v845 = vpop.f32.mrb[0].mxu0
        %v846 = vadd.f32 %v490, %v845
        %v847 = vpop.f32.mrb[0].mxu0
        %v848 = vadd.f32 %v490, %v847
        %849 = vmatprep.mubr.f32.mxu0 0.0
        %850 = vmatmul.mubr.f32.gmra.mrb[0].mxu0 %v530
        %v851 = vpop.f32.mrb[0].mxu0
        %v852 = vadd.f32 %v495, %v851
        %v853 = vpop.f32.mrb[0].mxu0
        %v854 = vadd.f32 %v495, %v853
        %855 = vmatprep.mubr.f32.mxu0 0.0
        %856 = vmatmul.mubr.f32.gmra.mrb[0].mxu0 %v533
        %v857 = vpop.f32.mrb[0].mxu0
        %v858 = vadd.f32 %v500, %v857
        %v859 = vpop.f32.mrb[0].mxu0
        %v860 = vadd.f32 %v500, %v859
        %861 = vmatprep.mubr.f32.mxu0 0.0
        %862 = vmatmul.mubr.f32.gmra.mrb[0].mxu0 %v536
        %v863 = vpop.f32.mrb[0].mxu0
        %v864 = vadd.f32 %v505, %v863
        %v865 = vpop.f32.mrb[0].mxu0
        %v866 = vadd.f32 %v505, %v865
        %867 = vmatprep.mubr.f32.mxu0 0.0
        %868 = vmatmul.mubr.f32.gmra.mrb[0].mxu0 %v539
        %v869 = vpop.f32.mrb[0].mxu0
        %v870 = vadd.f32 %v510, %v869
        %v871 = vpop.f32.mrb[0].mxu0
        %v872 = vadd.f32 %v510, %v871
        %873 = vmatprep.mubr.f32.mxu0 0.0
        %874 = vmatmul.mubr.f32.gmra.mrb[0].mxu0 %v542
        %v875 = vpop.f32.mrb[0].mxu0
        %v876 = vadd.f32 %v515, %v875
        %v877 = vpop.f32.mrb[0].mxu0
        %v878 = vadd.f32 %v515, %v877
        %879 = vmatprep.mubr.f32.mxu0 0.0
        %880 = vmatmul.mubr.f32.gmra.mrb[0].mxu0 %v545
        %v881 = vpop.f32.mrb[0].mxu0
        %v882 = vadd.f32 %v520, %v881
        %v883 = vpop.f32.mrb[0].mxu0
        %v884 = vadd.f32 %v520, %v883
        %885 = vdwg.mxu0
        %886 = vmatprep.subr.mxu0 %v465
        %887 = vmatpush1.msra.mxu0 %v464
        %888 = vmatprep.subr.mxu0 0.0
        %889 = vmatpush1.msra.mxu0 0.0
        %890 = vmatprep.subr.mxu0 0.0
        %891 = vmatpush1.msra.mxu0 0.0
        %892 = vmatprep.subr.mxu0 0.0
        %893 = vmatpush1.msra.mxu0 0.0
        %894 = vmatprep.subr.mxu0 0.0
        %895 = vmatpush1.msra.mxu0 0.0
        %896 = vmatprep.subr.mxu0 0.0
        %897 = vmatpush1.msra.mxu0 0.0
        %898 = vmatprep.subr.mxu0 0.0
        %899 = vmatpush1.msra.mxu0 0.0
        %900 = vmatprep.subr.mxu0 0.0
        %901 = vmatpush1.msra.mxu0 0.0
        %902 = vmatprep.subr.mxu0 0.0
        %903 = vmatpush1.msra.mxu0 0.0
        %904 = vmatprep.subr.mxu0 0.0
        %905 = vmatpush1.msra.mxu0 0.0
        %906 = vmatprep.subr.mxu0 0.0
        %907 = vmatpush1.msra.mxu0 0.0
        %908 = vmatprep.subr.mxu0 0.0
        %909 = vmatpush1.msra.mxu0 0.0
        %910 = vmatprep.subr.mxu0 0.0
        %911 = vmatpush1.msra.mxu0 0.0
        %912 = vmatprep.subr.mxu0 0.0
        %913 = vmatpush1.msra.mxu0 0.0
        %914 = vmatprep.subr.mxu0 0.0
        %915 = vmatpush1.msra.mxu0 0.0
        %916 = vmatprep.subr.mxu0 0.0
        %917 = vmatpush1.msra.mxu0 0.0
        %918 = vmatprep.subr.mxu0 0.0
        %919 = vmatpush1.msra.mxu0 0.0
        %920 = vmatprep.subr.mxu0 0.0
        %921 = vmatpush1.msra.mxu0 0.0
        %922 = vmatprep.subr.mxu0 0.0
        %923 = vmatpush1.msra.mxu0 0.0
        %924 = vmatprep.subr.mxu0 0.0
        %925 = vmatpush1.msra.mxu0 0.0
        %926 = vmatprep.subr.mxu0 0.0
        %927 = vmatpush1.msra.mxu0 0.0
        %928 = vmatprep.subr.mxu0 0.0
        %929 = vmatpush1.msra.mxu0 0.0
        %930 = vmatprep.subr.mxu0 0.0
        %931 = vmatpush1.msra.mxu0 0.0
        %932 = vmatprep.subr.mxu0 0.0
        %933 = vmatpush1.msra.mxu0 0.0
        %934 = vmatprep.subr.mxu0 0.0
        %935 = vmatpush1.msra.mxu0 0.0
        %936 = vmatprep.subr.mxu0 0.0
        %937 = vmatpush1.msra.mxu0 0.0
        %938 = vmatprep.subr.mxu0 0.0
        %939 = vmatpush1.msra.mxu0 0.0
        %940 = vmatprep.subr.mxu0 0.0
        %941 = vmatpush1.msra.mxu0 0.0
        %942 = vmatprep.subr.mxu0 0.0
        %943 = vmatpush1.msra.mxu0 0.0
        %944 = vmatprep.subr.mxu0 0.0
        %945 = vmatpush1.msra.mxu0 0.0
        %946 = vmatprep.subr.mxu0 0.0
        %947 = vmatpush1.msra.mxu0 0.0
        %948 = vmatprep.subr.mxu0 0.0
        %949 = vmatpush1.msra.mxu0 0.0
        %950 = vmatprep.mubr.f32.mxu0 0.0
        %951 = vmatmul.mubr.f32.gmra.mrb[0].mxu0 %v524
        %v952 = vpop.f32.mrb[0].mxu0
        %v953 = vadd.f32 %v485, %v952
        %v954 = vpop.f32.mrb[0].mxu0
        %v955 = vadd.f32 %v485, %v954
        %956 = vmatprep.mubr.f32.mxu0 0.0
        %957 = vmatmul.mubr.f32.gmra.mrb[0].mxu0 %v527
        %v958 = vpop.f32.mrb[0].mxu0
        %v959 = vadd.f32 %v490, %v958
        %v960 = vpop.f32.mrb[0].mxu0
        %v961 = vadd.f32 %v490, %v960
        %962 = vmatprep.mubr.f32.mxu0 0.0
        %963 = vmatmul.mubr.f32.gmra.mrb[0].mxu0 %v530
        %v964 = vpop.f32.mrb[0].mxu0
        %v965 = vadd.f32 %v495, %v964
        %v966 = vpop.f32.mrb[0].mxu0
        %v967 = vadd.f32 %v495, %v966
        %968 = vmatprep.mubr.f32.mxu0 0.0
        %969 = vmatmul.mubr.f32.gmra.mrb[0].mxu0 %v533
        %v970 = vpop.f32.mrb[0].mxu0
        %v971 = vadd.f32 %v500, %v970
        %v972 = vpop.f32.mrb[0].mxu0
        %v973 = vadd.f32 %v500, %v972
        %974 = vmatprep.mubr.f32.mxu0 0.0
        %975 = vmatmul.mubr.f32.gmra.mrb[0].mxu0 %v536
        %v976 = vpop.f32.mrb[0].mxu0
        %v977 = vadd.f32 %v505, %v976
        %v978 = vpop.f32.mrb[0].mxu0
        %v979 = vadd.f32 %v505, %v978
        %980 = vmatprep.mubr.f32.mxu0 0.0
        %981 = vmatmul.mubr.f32.gmra.mrb[0].mxu0 %v539
        %v982 = vpop.f32.mrb[0].mxu0
        %v983 = vadd.f32 %v510, %v982
        %v984 = vpop.f32.mrb[0].mxu0
        %v985 = vadd.f32 %v510, %v984
        %986 = vmatprep.mubr.f32.mxu0 0.0
        %987 = vmatmul.mubr.f32.gmra.mrb[0].mxu0 %v542
        %v988 = vpop.f32.mrb[0].mxu0
        %v989 = vadd.f32 %v515, %v988
        %v990 = vpop.f32.mrb[0].mxu0
        %v991 = vadd.f32 %v515, %v990
        %992 = vmatprep.mubr.f32.mxu0 0.0
        %993 = vmatmul.mubr.f32.gmra.mrb[0].mxu0 %v545
        %v994 = vpop.f32.mrb[0].mxu0
        %v995 = vadd.f32 %v520, %v994
        %v996 = vpop.f32.mrb[0].mxu0
        %v997 = vadd.f32 %v520, %v996
        %998 = vdwg.mxu0
        %v999 = vmax.f32 %v614, 0.0
        %v1000 = vmax.f32 %v616, 0.0
        %v1001 = vmax.f32 %v727, 0.0
        %v1002 = vmax.f32 %v729, 0.0
        %v1003 = vmax.f32 %v840, 0.0
        %v1004 = vmax.f32 %v842, 0.0
        %v1005 = vmax.f32 %v953, 0.0
        %v1006 = vmax.f32 %v955, 0.0
        %v1007 = vmax.f32 %v620, 0.0
        %v1008 = vmax.f32 %v622, 0.0
        %v1009 = vmax.f32 %v733, 0.0
        %v1010 = vmax.f32 %v735, 0.0
        %v1011 = vmax.f32 %v846, 0.0
        %v1012 = vmax.f32 %v848, 0.0
        %v1013 = vmax.f32 %v959, 0.0
        %v1014 = vmax.f32 %v961, 0.0
        %v1015 = vmax.f32 %v626, 0.0
        %v1016 = vmax.f32 %v628, 0.0
        %v1017 = vmax.f32 %v739, 0.0
        %v1018 = vmax.f32 %v741, 0.0
        %v1019 = vmax.f32 %v852, 0.0
        %v1020 = vmax.f32 %v854, 0.0
        %v1021 = vmax.f32 %v965, 0.0
        %v1022 = vmax.f32 %v967, 0.0
        %v1023 = vmax.f32 %v632, 0.0
        %v1024 = vmax.f32 %v634, 0.0
        %v1025 = vmax.f32 %v745, 0.0
        %v1026 = vmax.f32 %v747, 0.0
        %v1027 = vmax.f32 %v858, 0.0
        %v1028 = vmax.f32 %v860, 0.0
        %v1029 = vmax.f32 %v971, 0.0
        %v1030 = vmax.f32 %v973, 0.0
        %v1031 = vmax.f32 %v638, 0.0
        %v1032 = vmax.f32 %v640, 0.0
        %v1033 = vmax.f32 %v751, 0.0
        %v1034 = vmax.f32 %v753, 0.0
        %v1035 = vmax.f32 %v864, 0.0
        %v1036 = vmax.f32 %v866, 0.0
        %v1037 = vmax.f32 %v977, 0.0
        %v1038 = vmax.f32 %v979, 0.0
        %v1039 = vmax.f32 %v644, 0.0
        %v1040 = vmax.f32 %v646, 0.0
        %v1041 = vmax.f32 %v757, 0.0
        %v1042 = vmax.f32 %v759, 0.0
        %v1043 = vmax.f32 %v870, 0.0
        %v1044 = vmax.f32 %v872, 0.0
        %v1045 = vmax.f32 %v983, 0.0
        %v1046 = vmax.f32 %v985, 0.0
        %v1047 = vmax.f32 %v650, 0.0
        %v1048 = vmax.f32 %v652, 0.0
        %v1049 = vmax.f32 %v763, 0.0
        %v1050 = vmax.f32 %v765, 0.0
        %v1051 = vmax.f32 %v876, 0.0
        %v1052 = vmax.f32 %v878, 0.0
        %v1053 = vmax.f32 %v989, 0.0
        %v1054 = vmax.f32 %v991, 0.0
        %v1055 = vmax.f32 %v656, 0.0
        %v1056 = vmax.f32 %v658, 0.0
        %v1057 = vmax.f32 %v769, 0.0
        %v1058 = vmax.f32 %v771, 0.0
        %v1059 = vmax.f32 %v882, 0.0
        %v1060 = vmax.f32 %v884, 0.0
        %v1061 = vmax.f32 %v995, 0.0
        %v1062 = vmax.f32 %v997, 0.0
        %v1063 = vld [vmem:[%s453] sm:$0xff]
        %v1064 = vld [vmem:[%s453 + $0x8] sm:$0xff]
        %v1065 = vld [vmem:[%s453 + $0x10] sm:$0xff]
        %v1066 = vld [vmem:[%s453 + $0x18] sm:$0xff]
        %v1067 = vld [vmem:[%s453 + $0x20] sm:$0xff]
        %v1068 = vld [vmem:[%s453 + $0x28] sm:$0xff]
        %v1069 = vld [vmem:[%s453 + $0x30] sm:$0xff]
        %v1070 = vld [vmem:[%s453 + $0x38] sm:$0xff]
        %v1071 = vld [vmem:[%s6] sm:$0xff]
        %v1072 = vld [vmem:[%s6 + $0x8] sm:$0xff]
        %v1073 = vld [vmem:[%s6 + $0x10] sm:$0xff]
        %v1074 = vld [vmem:[%s6 + $0x18] sm:$0xff]
        %v1075 = vld [vmem:[%s6 + $0x20] sm:$0xff]
        %v1076 = vld [vmem:[%s6 + $0x28] sm:$0xff]
        %v1077 = vld [vmem:[%s6 + $0x30] sm:$0xff]
        %v1078 = vld [vmem:[%s6 + $0x38] sm:$0xff]
        %1080 = vset.pattern.permute.xlu0 0
        %1081 = vperm.xlu0 %1080, %v1071
        %v1082 = vpop.permute.xlu0 %1081
        %1085 = vset.pattern.permute.xlu0 0
        %1086 = vperm.xlu0 %1085, %v1072
        %v1087 = vpop.permute.xlu0 %1086
        %1090 = vset.pattern.permute.xlu0 0
        %1091 = vperm.xlu0 %1090, %v1073
        %v1092 = vpop.permute.xlu0 %1091
        %1095 = vset.pattern.permute.xlu0 0
        %1096 = vperm.xlu0 %1095, %v1074
        %v1097 = vpop.permute.xlu0 %1096
        %1100 = vset.pattern.permute.xlu0 0
        %1101 = vperm.xlu0 %1100, %v1075
        %v1102 = vpop.permute.xlu0 %1101
        %1105 = vset.pattern.permute.xlu0 0
        %1106 = vperm.xlu0 %1105, %v1076
        %v1107 = vpop.permute.xlu0 %1106
        %1110 = vset.pattern.permute.xlu0 0
        %1111 = vperm.xlu0 %1110, %v1077
        %v1112 = vpop.permute.xlu0 %1111
        %1115 = vset.pattern.permute.xlu0 0
        %1116 = vperm.xlu0 %1115, %v1078
        %v1117 = vpop.permute.xlu0 %1116
        %vm1119 = vcmask 523264
        %v1121 = vsel %vm1119, %v1063, 0
        %v1124 = vsel %vm1119, %v1064, 0
        %v1127 = vsel %vm1119, %v1065, 0
        %v1130 = vsel %vm1119, %v1066, 0
        %v1133 = vsel %vm1119, %v1067, 0
        %v1136 = vsel %vm1119, %v1068, 0
        %v1139 = vsel %vm1119, %v1069, 0
        %v1142 = vsel %vm1119, %v1070, 0
        %1144 = vmatprep.subr.mxu0 %v1000
        %1145 = vmatpush1.msra.mxu0 %v999
        %1146 = vmatprep.subr.mxu0 %v1008
        %1147 = vmatpush1.msra.mxu0 %v1007
        %1148 = vmatprep.subr.mxu0 %v1016
        %1149 = vmatpush1.msra.mxu0 %v1015
        %1150 = vmatprep.subr.mxu0 %v1024
        %1151 = vmatpush1.msra.mxu0 %v1023
        %1152 = vmatprep.subr.mxu0 %v1032
        %1153 = vmatpush1.msra.mxu0 %v1031
        %1154 = vmatprep.subr.mxu0 %v1040
        %1155 = vmatpush1.msra.mxu0 %v1039
        %1156 = vmatprep.subr.mxu0 %v1048
        %1157 = vmatpush1.msra.mxu0 %v1047
        %1158 = vmatprep.subr.mxu0 %v1056
        %1159 = vmatpush1.msra.mxu0 %v1055
        %1160 = vmatprep.subr.mxu0 0.0
        %1161 = vmatpush1.msra.mxu0 0.0
        %1162 = vmatprep.subr.mxu0 0.0
        %1163 = vmatpush1.msra.mxu0 0.0
        %1164 = vmatprep.subr.mxu0 0.0
        %1165 = vmatpush1.msra.mxu0 0.0
        %1166 = vmatprep.subr.mxu0 0.0
        %1167 = vmatpush1.msra.mxu0 0.0
        %1168 = vmatprep.subr.mxu0 0.0
        %1169 = vmatpush1.msra.mxu0 0.0
        %1170 = vmatprep.subr.mxu0 0.0
        %1171 = vmatpush1.msra.mxu0 0.0
        %1172 = vmatprep.subr.mxu0 0.0
        %1173 = vmatpush1.msra.mxu0 0.0
        %1174 = vmatprep.subr.mxu0 0.0
        %1175 = vmatpush1.msra.mxu0 0.0
        %1176 = vmatprep.subr.mxu0 0.0
        %1177 = vmatpush1.msra.mxu0 0.0
        %1178 = vmatprep.subr.mxu0 0.0
        %1179 = vmatpush1.msra.mxu0 0.0
        %1180 = vmatprep.subr.mxu0 0.0
        %1181 = vmatpush1.msra.mxu0 0.0
        %1182 = vmatprep.subr.mxu0 0.0
        %1183 = vmatpush1.msra.mxu0 0.0
        %1184 = vmatprep.subr.mxu0 0.0
        %1185 = vmatpush1.msra.mxu0 0.0
        %1186 = vmatprep.subr.mxu0 0.0
        %1187 = vmatpush1.msra.mxu0 0.0
        %1188 = vmatprep.subr.mxu0 0.0
        %1189 = vmatpush1.msra.mxu0 0.0
        %1190 = vmatprep.subr.mxu0 0.0
        %1191 = vmatpush1.msra.mxu0 0.0
        %1192 = vmatprep.subr.mxu0 0.0
        %1193 = vmatpush1.msra.mxu0 0.0
        %1194 = vmatprep.subr.mxu0 0.0
        %1195 = vmatpush1.msra.mxu0 0.0
        %1196 = vmatprep.subr.mxu0 0.0
        %1197 = vmatpush1.msra.mxu0 0.0
        %1198 = vmatprep.subr.mxu0 0.0
        %1199 = vmatpush1.msra.mxu0 0.0
        %1200 = vmatprep.subr.mxu0 0.0
        %1201 = vmatpush1.msra.mxu0 0.0
        %1202 = vmatprep.subr.mxu0 0.0
        %1203 = vmatpush1.msra.mxu0 0.0
        %1204 = vmatprep.subr.mxu0 0.0
        %1205 = vmatpush1.msra.mxu0 0.0
        %1206 = vmatprep.subr.mxu0 0.0
        %1207 = vmatpush1.msra.mxu0 0.0
        %1208 = vmatprep.mubr.f32.mxu0 0.0
        %1209 = vmatmul.mubr.f32.gmra.mrb[0].mxu0 %v1121
        %v1210 = vpop.f32.mrb[0].mxu0
        %v1211 = vadd.f32 %v1082, %v1210
        %v1212 = vpop.f32.mrb[0].mxu0
        %v1213 = vadd.f32 %v1082, %v1212
        %1214 = vmatprep.mubr.f32.mxu0 0.0
        %1215 = vmatmul.mubr.f32.gmra.mrb[0].mxu0 %v1124
        %v1216 = vpop.f32.mrb[0].mxu0
        %v1217 = vadd.f32 %v1087, %v1216
        %v1218 = vpop.f32.mrb[0].mxu0
        %v1219 = vadd.f32 %v1087, %v1218
        %1220 = vmatprep.mubr.f32.mxu0 0.0
        %1221 = vmatmul.mubr.f32.gmra.mrb[0].mxu0 %v1127
        %v1222 = vpop.f32.mrb[0].mxu0
        %v1223 = vadd.f32 %v1092, %v1222
        %v1224 = vpop.f32.mrb[0].mxu0
        %v1225 = vadd.f32 %v1092, %v1224
        %1226 = vmatprep.mubr.f32.mxu0 0.0
        %1227 = vmatmul.mubr.f32.gmra.mrb[0].mxu0 %v1130
        %v1228 = vpop.f32.mrb[0].mxu0
        %v1229 = vadd.f32 %v1097, %v1228
        %v1230 = vpop.f32.mrb[0].mxu0
        %v1231 = vadd.f32 %v1097, %v1230
        %1232 = vmatprep.mubr.f32.mxu0 0.0
        %1233 = vmatmul.mubr.f32.gmra.mrb[0].mxu0 %v1133
        %v1234 = vpop.f32.mrb[0].mxu0
        %v1235 = vadd.f32 %v1102, %v1234
        %v1236 = vpop.f32.mrb[0].mxu0
        %v1237 = vadd.f32 %v1102, %v1236
        %1238 = vmatprep.mubr.f32.mxu0 0.0
        %1239 = vmatmul.mubr.f32.gmra.mrb[0].mxu0 %v1136
        %v1240 = vpop.f32.mrb[0].mxu0
        %v1241 = vadd.f32 %v1107, %v1240
        %v1242 = vpop.f32.mrb[0].mxu0
        %v1243 = vadd.f32 %v1107, %v1242
        %1244 = vmatprep.mubr.f32.mxu0 0.0
        %1245 = vmatmul.mubr.f32.gmra.mrb[0].mxu0 %v1139
        %v1246 = vpop.f32.mrb[0].mxu0
        %v1247 = vadd.f32 %v1112, %v1246
        %v1248 = vpop.f32.mrb[0].mxu0
        %v1249 = vadd.f32 %v1112, %v1248
        %1250 = vmatprep.mubr.f32.mxu0 0.0
        %1251 = vmatmul.mubr.f32.gmra.mrb[0].mxu0 %v1142
        %v1252 = vpop.f32.mrb[0].mxu0
        %v1253 = vadd.f32 %v1117, %v1252
        %v1254 = vpop.f32.mrb[0].mxu0
        %v1255 = vadd.f32 %v1117, %v1254
        %1256 = vdwg.mxu0
        %1257 = vmatprep.subr.mxu0 %v1002
        %1258 = vmatpush1.msra.mxu0 %v1001
        %1259 = vmatprep.subr.mxu0 %v1010
        %1260 = vmatpush1.msra.mxu0 %v1009
        %1261 = vmatprep.subr.mxu0 %v1018
        %1262 = vmatpush1.msra.mxu0 %v1017
        %1263 = vmatprep.subr.mxu0 %v1026
        %1264 = vmatpush1.msra.mxu0 %v1025
        %1265 = vmatprep.subr.mxu0 %v1034
        %1266 = vmatpush1.msra.mxu0 %v1033
        %1267 = vmatprep.subr.mxu0 %v1042
        %1268 = vmatpush1.msra.mxu0 %v1041
        %1269 = vmatprep.subr.mxu0 %v1050
        %1270 = vmatpush1.msra.mxu0 %v1049
        %1271 = vmatprep.subr.mxu0 %v1058
        %1272 = vmatpush1.msra.mxu0 %v1057
        %1273 = vmatprep.subr.mxu0 0.0
        %1274 = vmatpush1.msra.mxu0 0.0
        %1275 = vmatprep.subr.mxu0 0.0
        %1276 = vmatpush1.msra.mxu0 0.0
        %1277 = vmatprep.subr.mxu0 0.0
        %1278 = vmatpush1.msra.mxu0 0.0
        %1279 = vmatprep.subr.mxu0 0.0
        %1280 = vmatpush1.msra.mxu0 0.0
        %1281 = vmatprep.subr.mxu0 0.0
        %1282 = vmatpush1.msra.mxu0 0.0
        %1283 = vmatprep.subr.mxu0 0.0
        %1284 = vmatpush1.msra.mxu0 0.0
        %1285 = vmatprep.subr.mxu0 0.0
        %1286 = vmatpush1.msra.mxu0 0.0
        %1287 = vmatprep.subr.mxu0 0.0
        %1288 = vmatpush1.msra.mxu0 0.0
        %1289 = vmatprep.subr.mxu0 0.0
        %1290 = vmatpush1.msra.mxu0 0.0
        %1291 = vmatprep.subr.mxu0 0.0
        %1292 = vmatpush1.msra.mxu0 0.0
        %1293 = vmatprep.subr.mxu0 0.0
        %1294 = vmatpush1.msra.mxu0 0.0
        %1295 = vmatprep.subr.mxu0 0.0
        %1296 = vmatpush1.msra.mxu0 0.0
        %1297 = vmatprep.subr.mxu0 0.0
        %1298 = vmatpush1.msra.mxu0 0.0
        %1299 = vmatprep.subr.mxu0 0.0
        %1300 = vmatpush1.msra.mxu0 0.0
        %1301 = vmatprep.subr.mxu0 0.0
        %1302 = vmatpush1.msra.mxu0 0.0
        %1303 = vmatprep.subr.mxu0 0.0
        %1304 = vmatpush1.msra.mxu0 0.0
        %1305 = vmatprep.subr.mxu0 0.0
        %1306 = vmatpush1.msra.mxu0 0.0
        %1307 = vmatprep.subr.mxu0 0.0
        %1308 = vmatpush1.msra.mxu0 0.0
        %1309 = vmatprep.subr.mxu0 0.0
        %1310 = vmatpush1.msra.mxu0 0.0
        %1311 = vmatprep.subr.mxu0 0.0
        %1312 = vmatpush1.msra.mxu0 0.0
        %1313 = vmatprep.subr.mxu0 0.0
        %1314 = vmatpush1.msra.mxu0 0.0
        %1315 = vmatprep.subr.mxu0 0.0
        %1316 = vmatpush1.msra.mxu0 0.0
        %1317 = vmatprep.subr.mxu0 0.0
        %1318 = vmatpush1.msra.mxu0 0.0
        %1319 = vmatprep.subr.mxu0 0.0
        %1320 = vmatpush1.msra.mxu0 0.0
        %1321 = vmatprep.mubr.f32.mxu0 0.0
        %1322 = vmatmul.mubr.f32.gmra.mrb[0].mxu0 %v1121
        %v1323 = vpop.f32.mrb[0].mxu0
        %v1324 = vadd.f32 %v1082, %v1323
        %v1325 = vpop.f32.mrb[0].mxu0
        %v1326 = vadd.f32 %v1082, %v1325
        %1327 = vmatprep.mubr.f32.mxu0 0.0
        %1328 = vmatmul.mubr.f32.gmra.mrb[0].mxu0 %v1124
        %v1329 = vpop.f32.mrb[0].mxu0
        %v1330 = vadd.f32 %v1087, %v1329
        %v1331 = vpop.f32.mrb[0].mxu0
        %v1332 = vadd.f32 %v1087, %v1331
        %1333 = vmatprep.mubr.f32.mxu0 0.0
        %1334 = vmatmul.mubr.f32.gmra.mrb[0].mxu0 %v1127
        %v1335 = vpop.f32.mrb[0].mxu0
        %v1336 = vadd.f32 %v1092, %v1335
        %v1337 = vpop.f32.mrb[0].mxu0
        %v1338 = vadd.f32 %v1092, %v1337
        %1339 = vmatprep.mubr.f32.mxu0 0.0
        %1340 = vmatmul.mubr.f32.gmra.mrb[0].mxu0 %v1130
        %v1341 = vpop.f32.mrb[0].mxu0
        %v1342 = vadd.f32 %v1097, %v1341
        %v1343 = vpop.f32.mrb[0].mxu0
        %v1344 = vadd.f32 %v1097, %v1343
        %1345 = vmatprep.mubr.f32.mxu0 0.0
        %1346 = vmatmul.mubr.f32.gmra.mrb[0].mxu0 %v1133
        %v1347 = vpop.f32.mrb[0].mxu0
        %v1348 = vadd.f32 %v1102, %v1347
        %v1349 = vpop.f32.mrb[0].mxu0
        %v1350 = vadd.f32 %v1102, %v1349
        %1351 = vmatprep.mubr.f32.mxu0 0.0
        %1352 = vmatmul.mubr.f32.gmra.mrb[0].mxu0 %v1136
        %v1353 = vpop.f32.mrb[0].mxu0
        %v1354 = vadd.f32 %v1107, %v1353
        %v1355 = vpop.f32.mrb[0].mxu0
        %v1356 = vadd.f32 %v1107, %v1355
        %1357 = vmatprep.mubr.f32.mxu0 0.0
        %1358 = vmatmul.mubr.f32.gmra.mrb[0].mxu0 %v1139
        %v1359 = vpop.f32.mrb[0].mxu0
        %v1360 = vadd.f32 %v1112, %v1359
        %v1361 = vpop.f32.mrb[0].mxu0
        %v1362 = vadd.f32 %v1112, %v1361
        %1363 = vmatprep.mubr.f32.mxu0 0.0
        %1364 = vmatmul.mubr.f32.gmra.mrb[0].mxu0 %v1142
        %v1365 = vpop.f32.mrb[0].mxu0
        %v1366 = vadd.f32 %v1117, %v1365
        %v1367 = vpop.f32.mrb[0].mxu0
        %v1368 = vadd.f32 %v1117, %v1367
        %1369 = vdwg.mxu0
        %1370 = vmatprep.subr.mxu0 %v1004
        %1371 = vmatpush1.msra.mxu0 %v1003
        %1372 = vmatprep.subr.mxu0 %v1012
        %1373 = vmatpush1.msra.mxu0 %v1011
        %1374 = vmatprep.subr.mxu0 %v1020
        %1375 = vmatpush1.msra.mxu0 %v1019
        %1376 = vmatprep.subr.mxu0 %v1028
        %1377 = vmatpush1.msra.mxu0 %v1027
        %1378 = vmatprep.subr.mxu0 %v1036
        %1379 = vmatpush1.msra.mxu0 %v1035
        %1380 = vmatprep.subr.mxu0 %v1044
        %1381 = vmatpush1.msra.mxu0 %v1043
        %1382 = vmatprep.subr.mxu0 %v1052
        %1383 = vmatpush1.msra.mxu0 %v1051
        %1384 = vmatprep.subr.mxu0 %v1060
        %1385 = vmatpush1.msra.mxu0 %v1059
        %1386 = vmatprep.subr.mxu0 0.0
        %1387 = vmatpush1.msra.mxu0 0.0
        %1388 = vmatprep.subr.mxu0 0.0
        %1389 = vmatpush1.msra.mxu0 0.0
        %1390 = vmatprep.subr.mxu0 0.0
        %1391 = vmatpush1.msra.mxu0 0.0
        %1392 = vmatprep.subr.mxu0 0.0
        %1393 = vmatpush1.msra.mxu0 0.0
        %1394 = vmatprep.subr.mxu0 0.0
        %1395 = vmatpush1.msra.mxu0 0.0
        %1396 = vmatprep.subr.mxu0 0.0
        %1397 = vmatpush1.msra.mxu0 0.0
        %1398 = vmatprep.subr.mxu0 0.0
        %1399 = vmatpush1.msra.mxu0 0.0
        %1400 = vmatprep.subr.mxu0 0.0
        %1401 = vmatpush1.msra.mxu0 0.0
        %1402 = vmatprep.subr.mxu0 0.0
        %1403 = vmatpush1.msra.mxu0 0.0
        %1404 = vmatprep.subr.mxu0 0.0
        %1405 = vmatpush1.msra.mxu0 0.0
        %1406 = vmatprep.subr.mxu0 0.0
        %1407 = vmatpush1.msra.mxu0 0.0
        %1408 = vmatprep.subr.mxu0 0.0
        %1409 = vmatpush1.msra.mxu0 0.0
        %1410 = vmatprep.subr.mxu0 0.0
        %1411 = vmatpush1.msra.mxu0 0.0
        %1412 = vmatprep.subr.mxu0 0.0
        %1413 = vmatpush1.msra.mxu0 0.0
        %1414 = vmatprep.subr.mxu0 0.0
        %1415 = vmatpush1.msra.mxu0 0.0
        %1416 = vmatprep.subr.mxu0 0.0
        %1417 = vmatpush1.msra.mxu0 0.0
        %1418 = vmatprep.subr.mxu0 0.0
        %1419 = vmatpush1.msra.mxu0 0.0
        %1420 = vmatprep.subr.mxu0 0.0
        %1421 = vmatpush1.msra.mxu0 0.0
        %1422 = vmatprep.subr.mxu0 0.0
        %1423 = vmatpush1.msra.mxu0 0.0
        %1424 = vmatprep.subr.mxu0 0.0
        %1425 = vmatpush1.msra.mxu0 0.0
        %1426 = vmatprep.subr.mxu0 0.0
        %1427 = vmatpush1.msra.mxu0 0.0
        %1428 = vmatprep.subr.mxu0 0.0
        %1429 = vmatpush1.msra.mxu0 0.0
        %1430 = vmatprep.subr.mxu0 0.0
        %1431 = vmatpush1.msra.mxu0 0.0
        %1432 = vmatprep.subr.mxu0 0.0
        %1433 = vmatpush1.msra.mxu0 0.0
        %1434 = vmatprep.mubr.f32.mxu0 0.0
        %1435 = vmatmul.mubr.f32.gmra.mrb[0].mxu0 %v1121
        %v1436 = vpop.f32.mrb[0].mxu0
        %v1437 = vadd.f32 %v1082, %v1436
        %v1438 = vpop.f32.mrb[0].mxu0
        %v1439 = vadd.f32 %v1082, %v1438
        %1440 = vmatprep.mubr.f32.mxu0 0.0
        %1441 = vmatmul.mubr.f32.gmra.mrb[0].mxu0 %v1124
        %v1442 = vpop.f32.mrb[0].mxu0
        %v1443 = vadd.f32 %v1087, %v1442
        %v1444 = vpop.f32.mrb[0].mxu0
        %v1445 = vadd.f32 %v1087, %v1444
        %1446 = vmatprep.mubr.f32.mxu0 0.0
        %1447 = vmatmul.mubr.f32.gmra.mrb[0].mxu0 %v1127
        %v1448 = vpop.f32.mrb[0].mxu0
        %v1449 = vadd.f32 %v1092, %v1448
        %v1450 = vpop.f32.mrb[0].mxu0
        %v1451 = vadd.f32 %v1092, %v1450
        %1452 = vmatprep.mubr.f32.mxu0 0.0
        %1453 = vmatmul.mubr.f32.gmra.mrb[0].mxu0 %v1130
        %v1454 = vpop.f32.mrb[0].mxu0
        %v1455 = vadd.f32 %v1097, %v1454
        %v1456 = vpop.f32.mrb[0].mxu0
        %v1457 = vadd.f32 %v1097, %v1456
        %1458 = vmatprep.mubr.f32.mxu0 0.0
        %1459 = vmatmul.mubr.f32.gmra.mrb[0].mxu0 %v1133
        %v1460 = vpop.f32.mrb[0].mxu0
        %v1461 = vadd.f32 %v1102, %v1460
        %v1462 = vpop.f32.mrb[0].mxu0
        %v1463 = vadd.f32 %v1102, %v1462
        %1464 = vmatprep.mubr.f32.mxu0 0.0
        %1465 = vmatmul.mubr.f32.gmra.mrb[0].mxu0 %v1136
        %v1466 = vpop.f32.mrb[0].mxu0
        %v1467 = vadd.f32 %v1107, %v1466
        %v1468 = vpop.f32.mrb[0].mxu0
        %v1469 = vadd.f32 %v1107, %v1468
        %1470 = vmatprep.mubr.f32.mxu0 0.0
        %1471 = vmatmul.mubr.f32.gmra.mrb[0].mxu0 %v1139
        %v1472 = vpop.f32.mrb[0].mxu0
        %v1473 = vadd.f32 %v1112, %v1472
        %v1474 = vpop.f32.mrb[0].mxu0
        %v1475 = vadd.f32 %v1112, %v1474
        %1476 = vmatprep.mubr.f32.mxu0 0.0
        %1477 = vmatmul.mubr.f32.gmra.mrb[0].mxu0 %v1142
        %v1478 = vpop.f32.mrb[0].mxu0
        %v1479 = vadd.f32 %v1117, %v1478
        %v1480 = vpop.f32.mrb[0].mxu0
        %v1481 = vadd.f32 %v1117, %v1480
        %1482 = vdwg.mxu0
        %1483 = vmatprep.subr.mxu0 %v1006
        %1484 = vmatpush1.msra.mxu0 %v1005
        %1485 = vmatprep.subr.mxu0 %v1014
        %1486 = vmatpush1.msra.mxu0 %v1013
        %1487 = vmatprep.subr.mxu0 %v1022
        %1488 = vmatpush1.msra.mxu0 %v1021
        %1489 = vmatprep.subr.mxu0 %v1030
        %1490 = vmatpush1.msra.mxu0 %v1029
        %1491 = vmatprep.subr.mxu0 %v1038
        %1492 = vmatpush1.msra.mxu0 %v1037
        %1493 = vmatprep.subr.mxu0 %v1046
        %1494 = vmatpush1.msra.mxu0 %v1045
        %1495 = vmatprep.subr.mxu0 %v1054
        %1496 = vmatpush1.msra.mxu0 %v1053
        %1497 = vmatprep.subr.mxu0 %v1062
        %1498 = vmatpush1.msra.mxu0 %v1061
        %1499 = vmatprep.subr.mxu0 0.0
        %1500 = vmatpush1.msra.mxu0 0.0
        %1501 = vmatprep.subr.mxu0 0.0
        %1502 = vmatpush1.msra.mxu0 0.0
        %1503 = vmatprep.subr.mxu0 0.0
        %1504 = vmatpush1.msra.mxu0 0.0
        %1505 = vmatprep.subr.mxu0 0.0
        %1506 = vmatpush1.msra.mxu0 0.0
        %1507 = vmatprep.subr.mxu0 0.0
        %1508 = vmatpush1.msra.mxu0 0.0
        %1509 = vmatprep.subr.mxu0 0.0
        %1510 = vmatpush1.msra.mxu0 0.0
        %1511 = vmatprep.subr.mxu0 0.0
        %1512 = vmatpush1.msra.mxu0 0.0
        %1513 = vmatprep.subr.mxu0 0.0
        %1514 = vmatpush1.msra.mxu0 0.0
        %1515 = vmatprep.subr.mxu0 0.0
        %1516 = vmatpush1.msra.mxu0 0.0
        %1517 = vmatprep.subr.mxu0 0.0
        %1518 = vmatpush1.msra.mxu0 0.0
        %1519 = vmatprep.subr.mxu0 0.0
        %1520 = vmatpush1.msra.mxu0 0.0
        %1521 = vmatprep.subr.mxu0 0.0
        %1522 = vmatpush1.msra.mxu0 0.0
        %1523 = vmatprep.subr.mxu0 0.0
        %1524 = vmatpush1.msra.mxu0 0.0
        %1525 = vmatprep.subr.mxu0 0.0
        %1526 = vmatpush1.msra.mxu0 0.0
        %1527 = vmatprep.subr.mxu0 0.0
        %1528 = vmatpush1.msra.mxu0 0.0
        %1529 = vmatprep.subr.mxu0 0.0
        %1530 = vmatpush1.msra.mxu0 0.0
        %1531 = vmatprep.subr.mxu0 0.0
        %1532 = vmatpush1.msra.mxu0 0.0
        %1533 = vmatprep.subr.mxu0 0.0
        %1534 = vmatpush1.msra.mxu0 0.0
        %1535 = vmatprep.subr.mxu0 0.0
        %1536 = vmatpush1.msra.mxu0 0.0
        %1537 = vmatprep.subr.mxu0 0.0
        %1538 = vmatpush1.msra.mxu0 0.0
        %1539 = vmatprep.subr.mxu0 0.0
        %1540 = vmatpush1.msra.mxu0 0.0
        %1541 = vmatprep.subr.mxu0 0.0
        %1542 = vmatpush1.msra.mxu0 0.0
        %1543 = vmatprep.subr.mxu0 0.0
        %1544 = vmatpush1.msra.mxu0 0.0
        %1545 = vmatprep.subr.mxu0 0.0
        %1546 = vmatpush1.msra.mxu0 0.0
        %1547 = vmatprep.mubr.f32.mxu0 0.0
        %1548 = vmatmul.mubr.f32.gmra.mrb[0].mxu0 %v1121
        %v1549 = vpop.f32.mrb[0].mxu0
        %v1550 = vadd.f32 %v1082, %v1549
        %v1551 = vpop.f32.mrb[0].mxu0
        %v1552 = vadd.f32 %v1082, %v1551
        %1553 = vmatprep.mubr.f32.mxu0 0.0
        %1554 = vmatmul.mubr.f32.gmra.mrb[0].mxu0 %v1124
        %v1555 = vpop.f32.mrb[0].mxu0
        %v1556 = vadd.f32 %v1087, %v1555
        %v1557 = vpop.f32.mrb[0].mxu0
        %v1558 = vadd.f32 %v1087, %v1557
        %1559 = vmatprep.mubr.f32.mxu0 0.0
        %1560 = vmatmul.mubr.f32.gmra.mrb[0].mxu0 %v1127
        %v1561 = vpop.f32.mrb[0].mxu0
        %v1562 = vadd.f32 %v1092, %v1561
        %v1563 = vpop.f32.mrb[0].mxu0
        %v1564 = vadd.f32 %v1092, %v1563
        %1565 = vmatprep.mubr.f32.mxu0 0.0
        %1566 = vmatmul.mubr.f32.gmra.mrb[0].mxu0 %v1130
        %v1567 = vpop.f32.mrb[0].mxu0
        %v1568 = vadd.f32 %v1097, %v1567
        %v1569 = vpop.f32.mrb[0].mxu0
        %v1570 = vadd.f32 %v1097, %v1569
        %1571 = vmatprep.mubr.f32.mxu0 0.0
        %1572 = vmatmul.mubr.f32.gmra.mrb[0].mxu0 %v1133
        %v1573 = vpop.f32.mrb[0].mxu0
        %v1574 = vadd.f32 %v1102, %v1573
        %v1575 = vpop.f32.mrb[0].mxu0
        %v1576 = vadd.f32 %v1102, %v1575
        %1577 = vmatprep.mubr.f32.mxu0 0.0
        %1578 = vmatmul.mubr.f32.gmra.mrb[0].mxu0 %v1136
        %v1579 = vpop.f32.mrb[0].mxu0
        %v1580 = vadd.f32 %v1107, %v1579
        %v1581 = vpop.f32.mrb[0].mxu0
        %v1582 = vadd.f32 %v1107, %v1581
        %1583 = vmatprep.mubr.f32.mxu0 0.0
        %1584 = vmatmul.mubr.f32.gmra.mrb[0].mxu0 %v1139
        %v1585 = vpop.f32.mrb[0].mxu0
        %v1586 = vadd.f32 %v1112, %v1585
        %v1587 = vpop.f32.mrb[0].mxu0
        %v1588 = vadd.f32 %v1112, %v1587
        %1589 = vmatprep.mubr.f32.mxu0 0.0
        %1590 = vmatmul.mubr.f32.gmra.mrb[0].mxu0 %v1142
        %v1591 = vpop.f32.mrb[0].mxu0
        %v1592 = vadd.f32 %v1117, %v1591
        %v1593 = vpop.f32.mrb[0].mxu0
        %v1594 = vadd.f32 %v1117, %v1593
        %1595 = vdwg.mxu0
        %v1596 = vmax.f32 %v1211, 0.0
        %v1597 = vmax.f32 %v1213, 0.0
        %v1598 = vmax.f32 %v1324, 0.0
        %v1599 = vmax.f32 %v1326, 0.0
        %v1600 = vmax.f32 %v1437, 0.0
        %v1601 = vmax.f32 %v1439, 0.0
        %v1602 = vmax.f32 %v1550, 0.0
        %v1603 = vmax.f32 %v1552, 0.0
        %v1604 = vmax.f32 %v1217, 0.0
        %v1605 = vmax.f32 %v1219, 0.0
        %v1606 = vmax.f32 %v1330, 0.0
        %v1607 = vmax.f32 %v1332, 0.0
        %v1608 = vmax.f32 %v1443, 0.0
        %v1609 = vmax.f32 %v1445, 0.0
        %v1610 = vmax.f32 %v1556, 0.0
        %v1611 = vmax.f32 %v1558, 0.0
        %v1612 = vmax.f32 %v1223, 0.0
        %v1613 = vmax.f32 %v1225, 0.0
        %v1614 = vmax.f32 %v1336, 0.0
        %v1615 = vmax.f32 %v1338, 0.0
        %v1616 = vmax.f32 %v1449, 0.0
        %v1617 = vmax.f32 %v1451, 0.0
        %v1618 = vmax.f32 %v1562, 0.0
        %v1619 = vmax.f32 %v1564, 0.0
        %v1620 = vmax.f32 %v1229, 0.0
        %v1621 = vmax.f32 %v1231, 0.0
        %v1622 = vmax.f32 %v1342, 0.0
        %v1623 = vmax.f32 %v1344, 0.0
        %v1624 = vmax.f32 %v1455, 0.0
        %v1625 = vmax.f32 %v1457, 0.0
        %v1626 = vmax.f32 %v1568, 0.0
        %v1627 = vmax.f32 %v1570, 0.0
        %v1628 = vmax.f32 %v1235, 0.0
        %v1629 = vmax.f32 %v1237, 0.0
        %v1630 = vmax.f32 %v1348, 0.0
        %v1631 = vmax.f32 %v1350, 0.0
        %v1632 = vmax.f32 %v1461, 0.0
        %v1633 = vmax.f32 %v1463, 0.0
        %v1634 = vmax.f32 %v1574, 0.0
        %v1635 = vmax.f32 %v1576, 0.0
        %v1636 = vmax.f32 %v1241, 0.0
        %v1637 = vmax.f32 %v1243, 0.0
        %v1638 = vmax.f32 %v1354, 0.0
        %v1639 = vmax.f32 %v1356, 0.0
        %v1640 = vmax.f32 %v1467, 0.0
        %v1641 = vmax.f32 %v1469, 0.0
        %v1642 = vmax.f32 %v1580, 0.0
        %v1643 = vmax.f32 %v1582, 0.0
        %v1644 = vmax.f32 %v1247, 0.0
        %v1645 = vmax.f32 %v1249, 0.0
        %v1646 = vmax.f32 %v1360, 0.0
        %v1647 = vmax.f32 %v1362, 0.0
        %v1648 = vmax.f32 %v1473, 0.0
        %v1649 = vmax.f32 %v1475, 0.0
        %v1650 = vmax.f32 %v1586, 0.0
        %v1651 = vmax.f32 %v1588, 0.0
        %v1652 = vmax.f32 %v1253, 0.0
        %v1653 = vmax.f32 %v1255, 0.0
        %v1654 = vmax.f32 %v1366, 0.0
        %v1655 = vmax.f32 %v1368, 0.0
        %v1656 = vmax.f32 %v1479, 0.0
        %v1657 = vmax.f32 %v1481, 0.0
        %v1658 = vmax.f32 %v1592, 0.0
        %v1659 = vmax.f32 %v1594, 0.0
        %v1660 = vld [vmem:[%s377] sm:$0xff]
        %v1661 = vld [vmem:[%s377 + $0x8] sm:$0xff]
        %v1662 = vld [vmem:[%s377 + $0x10] sm:$0xff]
        %v1663 = vld [vmem:[%s377 + $0x18] sm:$0xff]
        %v1664 = vld [vmem:[%s377 + $0x20] sm:$0xff]
        %v1665 = vld [vmem:[%s377 + $0x28] sm:$0xff]
        %v1666 = vld [vmem:[%s377 + $0x30] sm:$0xff]
        %v1667 = vld [vmem:[%s377 + $0x38] sm:$0xff]
        %v1668 = vld [vmem:[%s7] sm:$0xff]
        %v1669 = vld [vmem:[%s7 + $0x8] sm:$0xff]
        %v1670 = vld [vmem:[%s7 + $0x10] sm:$0xff]
        %v1671 = vld [vmem:[%s7 + $0x18] sm:$0xff]
        %v1672 = vld [vmem:[%s7 + $0x20] sm:$0xff]
        %v1673 = vld [vmem:[%s7 + $0x28] sm:$0xff]
        %v1674 = vld [vmem:[%s7 + $0x30] sm:$0xff]
        %v1675 = vld [vmem:[%s7 + $0x38] sm:$0xff]
        %1677 = vset.pattern.permute.xlu0 0
        %1678 = vperm.xlu0 %1677, %v1668
        %v1679 = vpop.permute.xlu0 %1678
        %1682 = vset.pattern.permute.xlu0 0
        %1683 = vperm.xlu0 %1682, %v1669
        %v1684 = vpop.permute.xlu0 %1683
        %1687 = vset.pattern.permute.xlu0 0
        %1688 = vperm.xlu0 %1687, %v1670
        %v1689 = vpop.permute.xlu0 %1688
        %1692 = vset.pattern.permute.xlu0 0
        %1693 = vperm.xlu0 %1692, %v1671
        %v1694 = vpop.permute.xlu0 %1693
        %1697 = vset.pattern.permute.xlu0 0
        %1698 = vperm.xlu0 %1697, %v1672
        %v1699 = vpop.permute.xlu0 %1698
        %1702 = vset.pattern.permute.xlu0 0
        %1703 = vperm.xlu0 %1702, %v1673
        %v1704 = vpop.permute.xlu0 %1703
        %1707 = vset.pattern.permute.xlu0 0
        %1708 = vperm.xlu0 %1707, %v1674
        %v1709 = vpop.permute.xlu0 %1708
        %1712 = vset.pattern.permute.xlu0 0
        %1713 = vperm.xlu0 %1712, %v1675
        %v1714 = vpop.permute.xlu0 %1713
        %v1717 = vsel %vm1119, %v1660, 0
        %v1720 = vsel %vm1119, %v1661, 0
        %v1723 = vsel %vm1119, %v1662, 0
        %v1726 = vsel %vm1119, %v1663, 0
        %v1729 = vsel %vm1119, %v1664, 0
        %v1732 = vsel %vm1119, %v1665, 0
        %v1735 = vsel %vm1119, %v1666, 0
        %v1738 = vsel %vm1119, %v1667, 0
        %1740 = vmatprep.subr.mxu0 %v1597
        %1741 = vmatpush1.msra.mxu0 %v1596
        %1742 = vmatprep.subr.mxu0 %v1605
        %1743 = vmatpush1.msra.mxu0 %v1604
        %1744 = vmatprep.subr.mxu0 %v1613
        %1745 = vmatpush1.msra.mxu0 %v1612
        %1746 = vmatprep.subr.mxu0 %v1621
        %1747 = vmatpush1.msra.mxu0 %v1620
        %1748 = vmatprep.subr.mxu0 %v1629
        %1749 = vmatpush1.msra.mxu0 %v1628
        %1750 = vmatprep.subr.mxu0 %v1637
        %1751 = vmatpush1.msra.mxu0 %v1636
        %1752 = vmatprep.subr.mxu0 %v1645
        %1753 = vmatpush1.msra.mxu0 %v1644
        %1754 = vmatprep.subr.mxu0 %v1653
        %1755 = vmatpush1.msra.mxu0 %v1652
        %1756 = vmatprep.subr.mxu0 0.0
        %1757 = vmatpush1.msra.mxu0 0.0
        %1758 = vmatprep.subr.mxu0 0.0
        %1759 = vmatpush1.msra.mxu0 0.0
        %1760 = vmatprep.subr.mxu0 0.0
        %1761 = vmatpush1.msra.mxu0 0.0
        %1762 = vmatprep.subr.mxu0 0.0
        %1763 = vmatpush1.msra.mxu0 0.0
        %1764 = vmatprep.subr.mxu0 0.0
        %1765 = vmatpush1.msra.mxu0 0.0
        %1766 = vmatprep.subr.mxu0 0.0
        %1767 = vmatpush1.msra.mxu0 0.0
        %1768 = vmatprep.subr.mxu0 0.0
        %1769 = vmatpush1.msra.mxu0 0.0
        %1770 = vmatprep.subr.mxu0 0.0
        %1771 = vmatpush1.msra.mxu0 0.0
        %1772 = vmatprep.subr.mxu0 0.0
        %1773 = vmatpush1.msra.mxu0 0.0
        %1774 = vmatprep.subr.mxu0 0.0
        %1775 = vmatpush1.msra.mxu0 0.0
        %1776 = vmatprep.subr.mxu0 0.0
        %1777 = vmatpush1.msra.mxu0 0.0
        %1778 = vmatprep.subr.mxu0 0.0
        %1779 = vmatpush1.msra.mxu0 0.0
        %1780 = vmatprep.subr.mxu0 0.0
        %1781 = vmatpush1.msra.mxu0 0.0
        %1782 = vmatprep.subr.mxu0 0.0
        %1783 = vmatpush1.msra.mxu0 0.0
        %1784 = vmatprep.subr.mxu0 0.0
        %1785 = vmatpush1.msra.mxu0 0.0
        %1786 = vmatprep.subr.mxu0 0.0
        %1787 = vmatpush1.msra.mxu0 0.0
        %1788 = vmatprep.subr.mxu0 0.0
        %1789 = vmatpush1.msra.mxu0 0.0
        %1790 = vmatprep.subr.mxu0 0.0
        %1791 = vmatpush1.msra.mxu0 0.0
        %1792 = vmatprep.subr.mxu0 0.0
        %1793 = vmatpush1.msra.mxu0 0.0
        %1794 = vmatprep.subr.mxu0 0.0
        %1795 = vmatpush1.msra.mxu0 0.0
        %1796 = vmatprep.subr.mxu0 0.0
        %1797 = vmatpush1.msra.mxu0 0.0
        %1798 = vmatprep.subr.mxu0 0.0
        %1799 = vmatpush1.msra.mxu0 0.0
        %1800 = vmatprep.subr.mxu0 0.0
        %1801 = vmatpush1.msra.mxu0 0.0
        %1802 = vmatprep.subr.mxu0 0.0
        %1803 = vmatpush1.msra.mxu0 0.0
        %1804 = vmatprep.mubr.f32.mxu0 0.0
        %1805 = vmatmul.mubr.f32.gmra.mrb[0].mxu0 %v1717
        %v1806 = vpop.f32.mrb[0].mxu0
        %v1807 = vadd.f32 %v1679, %v1806
        %v1808 = vpop.f32.mrb[0].mxu0
        %v1809 = vadd.f32 %v1679, %v1808
        %1810 = vmatprep.mubr.f32.mxu0 0.0
        %1811 = vmatmul.mubr.f32.gmra.mrb[0].mxu0 %v1720
        %v1812 = vpop.f32.mrb[0].mxu0
        %v1813 = vadd.f32 %v1684, %v1812
        %v1814 = vpop.f32.mrb[0].mxu0
        %v1815 = vadd.f32 %v1684, %v1814
        %1816 = vmatprep.mubr.f32.mxu0 0.0
        %1817 = vmatmul.mubr.f32.gmra.mrb[0].mxu0 %v1723
        %v1818 = vpop.f32.mrb[0].mxu0
        %v1819 = vadd.f32 %v1689, %v1818
        %v1820 = vpop.f32.mrb[0].mxu0
        %v1821 = vadd.f32 %v1689, %v1820
        %1822 = vmatprep.mubr.f32.mxu0 0.0
        %1823 = vmatmul.mubr.f32.gmra.mrb[0].mxu0 %v1726
        %v1824 = vpop.f32.mrb[0].mxu0
        %v1825 = vadd.f32 %v1694, %v1824
        %v1826 = vpop.f32.mrb[0].mxu0
        %v1827 = vadd.f32 %v1694, %v1826
        %1828 = vmatprep.mubr.f32.mxu0 0.0
        %1829 = vmatmul.mubr.f32.gmra.mrb[0].mxu0 %v1729
        %v1830 = vpop.f32.mrb[0].mxu0
        %v1831 = vadd.f32 %v1699, %v1830
        %v1832 = vpop.f32.mrb[0].mxu0
        %v1833 = vadd.f32 %v1699, %v1832
        %1834 = vmatprep.mubr.f32.mxu0 0.0
        %1835 = vmatmul.mubr.f32.gmra.mrb[0].mxu0 %v1732
        %v1836 = vpop.f32.mrb[0].mxu0
        %v1837 = vadd.f32 %v1704, %v1836
        %v1838 = vpop.f32.mrb[0].mxu0
        %v1839 = vadd.f32 %v1704, %v1838
        %1840 = vmatprep.mubr.f32.mxu0 0.0
        %1841 = vmatmul.mubr.f32.gmra.mrb[0].mxu0 %v1735
        %v1842 = vpop.f32.mrb[0].mxu0
        %v1843 = vadd.f32 %v1709, %v1842
        %v1844 = vpop.f32.mrb[0].mxu0
        %v1845 = vadd.f32 %v1709, %v1844
        %1846 = vmatprep.mubr.f32.mxu0 0.0
        %1847 = vmatmul.mubr.f32.gmra.mrb[0].mxu0 %v1738
        %v1848 = vpop.f32.mrb[0].mxu0
        %v1849 = vadd.f32 %v1714, %v1848
        %v1850 = vpop.f32.mrb[0].mxu0
        %v1851 = vadd.f32 %v1714, %v1850
        %1852 = vdwg.mxu0
        %1853 = vmatprep.subr.mxu0 %v1599
        %1854 = vmatpush1.msra.mxu0 %v1598
        %1855 = vmatprep.subr.mxu0 %v1607
        %1856 = vmatpush1.msra.mxu0 %v1606
        %1857 = vmatprep.subr.mxu0 %v1615
        %1858 = vmatpush1.msra.mxu0 %v1614
        %1859 = vmatprep.subr.mxu0 %v1623
        %1860 = vmatpush1.msra.mxu0 %v1622
        %1861 = vmatprep.subr.mxu0 %v1631
        %1862 = vmatpush1.msra.mxu0 %v1630
        %1863 = vmatprep.subr.mxu0 %v1639
        %1864 = vmatpush1.msra.mxu0 %v1638
        %1865 = vmatprep.subr.mxu0 %v1647
        %1866 = vmatpush1.msra.mxu0 %v1646
        %1867 = vmatprep.subr.mxu0 %v1655
        %1868 = vmatpush1.msra.mxu0 %v1654
        %1869 = vmatprep.subr.mxu0 0.0
        %1870 = vmatpush1.msra.mxu0 0.0
        %1871 = vmatprep.subr.mxu0 0.0
        %1872 = vmatpush1.msra.mxu0 0.0
        %1873 = vmatprep.subr.mxu0 0.0
        %1874 = vmatpush1.msra.mxu0 0.0
        %1875 = vmatprep.subr.mxu0 0.0
        %1876 = vmatpush1.msra.mxu0 0.0
        %1877 = vmatprep.subr.mxu0 0.0
        %1878 = vmatpush1.msra.mxu0 0.0
        %1879 = vmatprep.subr.mxu0 0.0
        %1880 = vmatpush1.msra.mxu0 0.0
        %1881 = vmatprep.subr.mxu0 0.0
        %1882 = vmatpush1.msra.mxu0 0.0
        %1883 = vmatprep.subr.mxu0 0.0
        %1884 = vmatpush1.msra.mxu0 0.0
        %1885 = vmatprep.subr.mxu0 0.0
        %1886 = vmatpush1.msra.mxu0 0.0
        %1887 = vmatprep.subr.mxu0 0.0
        %1888 = vmatpush1.msra.mxu0 0.0
        %1889 = vmatprep.subr.mxu0 0.0
        %1890 = vmatpush1.msra.mxu0 0.0
        %1891 = vmatprep.subr.mxu0 0.0
        %1892 = vmatpush1.msra.mxu0 0.0
        %1893 = vmatprep.subr.mxu0 0.0
        %1894 = vmatpush1.msra.mxu0 0.0
        %1895 = vmatprep.subr.mxu0 0.0
        %1896 = vmatpush1.msra.mxu0 0.0
        %1897 = vmatprep.subr.mxu0 0.0
        %1898 = vmatpush1.msra.mxu0 0.0
        %1899 = vmatprep.subr.mxu0 0.0
        %1900 = vmatpush1.msra.mxu0 0.0
        %1901 = vmatprep.subr.mxu0 0.0
        %1902 = vmatpush1.msra.mxu0 0.0
        %1903 = vmatprep.subr.mxu0 0.0
        %1904 = vmatpush1.msra.mxu0 0.0
        %1905 = vmatprep.subr.mxu0 0.0
        %1906 = vmatpush1.msra.mxu0 0.0
        %1907 = vmatprep.subr.mxu0 0.0
        %1908 = vmatpush1.msra.mxu0 0.0
        %1909 = vmatprep.subr.mxu0 0.0
        %1910 = vmatpush1.msra.mxu0 0.0
        %1911 = vmatprep.subr.mxu0 0.0
        %1912 = vmatpush1.msra.mxu0 0.0
        %1913 = vmatprep.subr.mxu0 0.0
        %1914 = vmatpush1.msra.mxu0 0.0
        %1915 = vmatprep.subr.mxu0 0.0
        %1916 = vmatpush1.msra.mxu0 0.0
        %1917 = vmatprep.mubr.f32.mxu0 0.0
        %1918 = vmatmul.mubr.f32.gmra.mrb[0].mxu0 %v1717
        %v1919 = vpop.f32.mrb[0].mxu0
        %v1920 = vadd.f32 %v1679, %v1919
        %v1921 = vpop.f32.mrb[0].mxu0
        %v1922 = vadd.f32 %v1679, %v1921
        %1923 = vmatprep.mubr.f32.mxu0 0.0
        %1924 = vmatmul.mubr.f32.gmra.mrb[0].mxu0 %v1720
        %v1925 = vpop.f32.mrb[0].mxu0
        %v1926 = vadd.f32 %v1684, %v1925
        %v1927 = vpop.f32.mrb[0].mxu0
        %v1928 = vadd.f32 %v1684, %v1927
        %1929 = vmatprep.mubr.f32.mxu0 0.0
        %1930 = vmatmul.mubr.f32.gmra.mrb[0].mxu0 %v1723
        %v1931 = vpop.f32.mrb[0].mxu0
        %v1932 = vadd.f32 %v1689, %v1931
        %v1933 = vpop.f32.mrb[0].mxu0
        %v1934 = vadd.f32 %v1689, %v1933
        %1935 = vmatprep.mubr.f32.mxu0 0.0
        %1936 = vmatmul.mubr.f32.gmra.mrb[0].mxu0 %v1726
        %v1937 = vpop.f32.mrb[0].mxu0
        %v1938 = vadd.f32 %v1694, %v1937
        %v1939 = vpop.f32.mrb[0].mxu0
        %v1940 = vadd.f32 %v1694, %v1939
        %1941 = vmatprep.mubr.f32.mxu0 0.0
        %1942 = vmatmul.mubr.f32.gmra.mrb[0].mxu0 %v1729
        %v1943 = vpop.f32.mrb[0].mxu0
        %v1944 = vadd.f32 %v1699, %v1943
        %v1945 = vpop.f32.mrb[0].mxu0
        %v1946 = vadd.f32 %v1699, %v1945
        %1947 = vmatprep.mubr.f32.mxu0 0.0
        %1948 = vmatmul.mubr.f32.gmra.mrb[0].mxu0 %v1732
        %v1949 = vpop.f32.mrb[0].mxu0
        %v1950 = vadd.f32 %v1704, %v1949
        %v1951 = vpop.f32.mrb[0].mxu0
        %v1952 = vadd.f32 %v1704, %v1951
        %1953 = vmatprep.mubr.f32.mxu0 0.0
        %1954 = vmatmul.mubr.f32.gmra.mrb[0].mxu0 %v1735
        %v1955 = vpop.f32.mrb[0].mxu0
        %v1956 = vadd.f32 %v1709, %v1955
        %v1957 = vpop.f32.mrb[0].mxu0
        %v1958 = vadd.f32 %v1709, %v1957
        %1959 = vmatprep.mubr.f32.mxu0 0.0
        %1960 = vmatmul.mubr.f32.gmra.mrb[0].mxu0 %v1738
        %v1961 = vpop.f32.mrb[0].mxu0
        %v1962 = vadd.f32 %v1714, %v1961
        %v1963 = vpop.f32.mrb[0].mxu0
        %v1964 = vadd.f32 %v1714, %v1963
        %1965 = vdwg.mxu0
        %1966 = vmatprep.subr.mxu0 %v1601
        %1967 = vmatpush1.msra.mxu0 %v1600
        %1968 = vmatprep.subr.mxu0 %v1609
        %1969 = vmatpush1.msra.mxu0 %v1608
        %1970 = vmatprep.subr.mxu0 %v1617
        %1971 = vmatpush1.msra.mxu0 %v1616
        %1972 = vmatprep.subr.mxu0 %v1625
        %1973 = vmatpush1.msra.mxu0 %v1624
        %1974 = vmatprep.subr.mxu0 %v1633
        %1975 = vmatpush1.msra.mxu0 %v1632
        %1976 = vmatprep.subr.mxu0 %v1641
        %1977 = vmatpush1.msra.mxu0 %v1640
        %1978 = vmatprep.subr.mxu0 %v1649
        %1979 = vmatpush1.msra.mxu0 %v1648
        %1980 = vmatprep.subr.mxu0 %v1657
        %1981 = vmatpush1.msra.mxu0 %v1656
        %1982 = vmatprep.subr.mxu0 0.0
        %1983 = vmatpush1.msra.mxu0 0.0
        %1984 = vmatprep.subr.mxu0 0.0
        %1985 = vmatpush1.msra.mxu0 0.0
        %1986 = vmatprep.subr.mxu0 0.0
        %1987 = vmatpush1.msra.mxu0 0.0
        %1988 = vmatprep.subr.mxu0 0.0
        %1989 = vmatpush1.msra.mxu0 0.0
        %1990 = vmatprep.subr.mxu0 0.0
        %1991 = vmatpush1.msra.mxu0 0.0
        %1992 = vmatprep.subr.mxu0 0.0
        %1993 = vmatpush1.msra.mxu0 0.0
        %1994 = vmatprep.subr.mxu0 0.0
        %1995 = vmatpush1.msra.mxu0 0.0
        %1996 = vmatprep.subr.mxu0 0.0
        %1997 = vmatpush1.msra.mxu0 0.0
        %1998 = vmatprep.subr.mxu0 0.0
        %1999 = vmatpush1.msra.mxu0 0.0
        %2000 = vmatprep.subr.mxu0 0.0
        %2001 = vmatpush1.msra.mxu0 0.0
        %2002 = vmatprep.subr.mxu0 0.0
        %2003 = vmatpush1.msra.mxu0 0.0
        %2004 = vmatprep.subr.mxu0 0.0
        %2005 = vmatpush1.msra.mxu0 0.0
        %2006 = vmatprep.subr.mxu0 0.0
        %2007 = vmatpush1.msra.mxu0 0.0
        %2008 = vmatprep.subr.mxu0 0.0
        %2009 = vmatpush1.msra.mxu0 0.0
        %2010 = vmatprep.subr.mxu0 0.0
        %2011 = vmatpush1.msra.mxu0 0.0
        %2012 = vmatprep.subr.mxu0 0.0
        %2013 = vmatpush1.msra.mxu0 0.0
        %2014 = vmatprep.subr.mxu0 0.0
        %2015 = vmatpush1.msra.mxu0 0.0
        %2016 = vmatprep.subr.mxu0 0.0
        %2017 = vmatpush1.msra.mxu0 0.0
        %2018 = vmatprep.subr.mxu0 0.0
        %2019 = vmatpush1.msra.mxu0 0.0
        %2020 = vmatprep.subr.mxu0 0.0
        %2021 = vmatpush1.msra.mxu0 0.0
        %2022 = vmatprep.subr.mxu0 0.0
        %2023 = vmatpush1.msra.mxu0 0.0
        %2024 = vmatprep.subr.mxu0 0.0
        %2025 = vmatpush1.msra.mxu0 0.0
        %2026 = vmatprep.subr.mxu0 0.0
        %2027 = vmatpush1.msra.mxu0 0.0
        %2028 = vmatprep.subr.mxu0 0.0
        %2029 = vmatpush1.msra.mxu0 0.0
        %2030 = vmatprep.mubr.f32.mxu0 0.0
        %2031 = vmatmul.mubr.f32.gmra.mrb[0].mxu0 %v1717
        %v2032 = vpop.f32.mrb[0].mxu0
        %v2033 = vadd.f32 %v1679, %v2032
        %v2034 = vpop.f32.mrb[0].mxu0
        %v2035 = vadd.f32 %v1679, %v2034
        %2036 = vmatprep.mubr.f32.mxu0 0.0
        %2037 = vmatmul.mubr.f32.gmra.mrb[0].mxu0 %v1720
        %v2038 = vpop.f32.mrb[0].mxu0
        %v2039 = vadd.f32 %v1684, %v2038
        %v2040 = vpop.f32.mrb[0].mxu0
        %v2041 = vadd.f32 %v1684, %v2040
        %2042 = vmatprep.mubr.f32.mxu0 0.0
        %2043 = vmatmul.mubr.f32.gmra.mrb[0].mxu0 %v1723
        %v2044 = vpop.f32.mrb[0].mxu0
        %v2045 = vadd.f32 %v1689, %v2044
        %v2046 = vpop.f32.mrb[0].mxu0
        %v2047 = vadd.f32 %v1689, %v2046
        %2048 = vmatprep.mubr.f32.mxu0 0.0
        %2049 = vmatmul.mubr.f32.gmra.mrb[0].mxu0 %v1726
        %v2050 = vpop.f32.mrb[0].mxu0
        %v2051 = vadd.f32 %v1694, %v2050
        %v2052 = vpop.f32.mrb[0].mxu0
        %v2053 = vadd.f32 %v1694, %v2052
        %2054 = vmatprep.mubr.f32.mxu0 0.0
        %2055 = vmatmul.mubr.f32.gmra.mrb[0].mxu0 %v1729
        %v2056 = vpop.f32.mrb[0].mxu0
        %v2057 = vadd.f32 %v1699, %v2056
        %v2058 = vpop.f32.mrb[0].mxu0
        %v2059 = vadd.f32 %v1699, %v2058
        %2060 = vmatprep.mubr.f32.mxu0 0.0
        %2061 = vmatmul.mubr.f32.gmra.mrb[0].mxu0 %v1732
        %v2062 = vpop.f32.mrb[0].mxu0
        %v2063 = vadd.f32 %v1704, %v2062
        %v2064 = vpop.f32.mrb[0].mxu0
        %v2065 = vadd.f32 %v1704, %v2064
        %2066 = vmatprep.mubr.f32.mxu0 0.0
        %2067 = vmatmul.mubr.f32.gmra.mrb[0].mxu0 %v1735
        %v2068 = vpop.f32.mrb[0].mxu0
        %v2069 = vadd.f32 %v1709, %v2068
        %v2070 = vpop.f32.mrb[0].mxu0
        %v2071 = vadd.f32 %v1709, %v2070
        %2072 = vmatprep.mubr.f32.mxu0 0.0
        %2073 = vmatmul.mubr.f32.gmra.mrb[0].mxu0 %v1738
        %v2074 = vpop.f32.mrb[0].mxu0
        %v2075 = vadd.f32 %v1714, %v2074
        %v2076 = vpop.f32.mrb[0].mxu0
        %v2077 = vadd.f32 %v1714, %v2076
        %2078 = vdwg.mxu0
        %2079 = vmatprep.subr.mxu0 %v1603
        %2080 = vmatpush1.msra.mxu0 %v1602
        %2081 = vmatprep.subr.mxu0 %v1611
        %2082 = vmatpush1.msra.mxu0 %v1610
        %2083 = vmatprep.subr.mxu0 %v1619
        %2084 = vmatpush1.msra.mxu0 %v1618
        %2085 = vmatprep.subr.mxu0 %v1627
        %2086 = vmatpush1.msra.mxu0 %v1626
        %2087 = vmatprep.subr.mxu0 %v1635
        %2088 = vmatpush1.msra.mxu0 %v1634
        %2089 = vmatprep.subr.mxu0 %v1643
        %2090 = vmatpush1.msra.mxu0 %v1642
        %2091 = vmatprep.subr.mxu0 %v1651
        %2092 = vmatpush1.msra.mxu0 %v1650
        %2093 = vmatprep.subr.mxu0 %v1659
        %2094 = vmatpush1.msra.mxu0 %v1658
        %2095 = vmatprep.subr.mxu0 0.0
        %2096 = vmatpush1.msra.mxu0 0.0
        %2097 = vmatprep.subr.mxu0 0.0
        %2098 = vmatpush1.msra.mxu0 0.0
        %2099 = vmatprep.subr.mxu0 0.0
        %2100 = vmatpush1.msra.mxu0 0.0
        %2101 = vmatprep.subr.mxu0 0.0
        %2102 = vmatpush1.msra.mxu0 0.0
        %2103 = vmatprep.subr.mxu0 0.0
        %2104 = vmatpush1.msra.mxu0 0.0
        %2105 = vmatprep.subr.mxu0 0.0
        %2106 = vmatpush1.msra.mxu0 0.0
        %2107 = vmatprep.subr.mxu0 0.0
        %2108 = vmatpush1.msra.mxu0 0.0
        %2109 = vmatprep.subr.mxu0 0.0
        %2110 = vmatpush1.msra.mxu0 0.0
        %2111 = vmatprep.subr.mxu0 0.0
        %2112 = vmatpush1.msra.mxu0 0.0
        %2113 = vmatprep.subr.mxu0 0.0
        %2114 = vmatpush1.msra.mxu0 0.0
        %2115 = vmatprep.subr.mxu0 0.0
        %2116 = vmatpush1.msra.mxu0 0.0
        %2117 = vmatprep.subr.mxu0 0.0
        %2118 = vmatpush1.msra.mxu0 0.0
        %2119 = vmatprep.subr.mxu0 0.0
        %2120 = vmatpush1.msra.mxu0 0.0
        %2121 = vmatprep.subr.mxu0 0.0
        %2122 = vmatpush1.msra.mxu0 0.0
        %2123 = vmatprep.subr.mxu0 0.0
        %2124 = vmatpush1.msra.mxu0 0.0
        %2125 = vmatprep.subr.mxu0 0.0
        %2126 = vmatpush1.msra.mxu0 0.0
        %2127 = vmatprep.subr.mxu0 0.0
        %2128 = vmatpush1.msra.mxu0 0.0
        %2129 = vmatprep.subr.mxu0 0.0
        %2130 = vmatpush1.msra.mxu0 0.0
        %2131 = vmatprep.subr.mxu0 0.0
        %2132 = vmatpush1.msra.mxu0 0.0
        %2133 = vmatprep.subr.mxu0 0.0
        %2134 = vmatpush1.msra.mxu0 0.0
        %2135 = vmatprep.subr.mxu0 0.0
        %2136 = vmatpush1.msra.mxu0 0.0
        %2137 = vmatprep.subr.mxu0 0.0
        %2138 = vmatpush1.msra.mxu0 0.0
        %2139 = vmatprep.subr.mxu0 0.0
        %2140 = vmatpush1.msra.mxu0 0.0
        %2141 = vmatprep.subr.mxu0 0.0
        %2142 = vmatpush1.msra.mxu0 0.0
        %2143 = vmatprep.mubr.f32.mxu0 0.0
        %2144 = vmatmul.mubr.f32.gmra.mrb[0].mxu0 %v1717
        %v2145 = vpop.f32.mrb[0].mxu0
        %v2146 = vadd.f32 %v1679, %v2145
        %v2147 = vpop.f32.mrb[0].mxu0
        %v2148 = vadd.f32 %v1679, %v2147
        %2149 = vmatprep.mubr.f32.mxu0 0.0
        %2150 = vmatmul.mubr.f32.gmra.mrb[0].mxu0 %v1720
        %v2151 = vpop.f32.mrb[0].mxu0
        %v2152 = vadd.f32 %v1684, %v2151
        %v2153 = vpop.f32.mrb[0].mxu0
        %v2154 = vadd.f32 %v1684, %v2153
        %2155 = vmatprep.mubr.f32.mxu0 0.0
        %2156 = vmatmul.mubr.f32.gmra.mrb[0].mxu0 %v1723
        %v2157 = vpop.f32.mrb[0].mxu0
        %v2158 = vadd.f32 %v1689, %v2157
        %v2159 = vpop.f32.mrb[0].mxu0
        %v2160 = vadd.f32 %v1689, %v2159
        %2161 = vmatprep.mubr.f32.mxu0 0.0
        %2162 = vmatmul.mubr.f32.gmra.mrb[0].mxu0 %v1726
        %v2163 = vpop.f32.mrb[0].mxu0
        %v2164 = vadd.f32 %v1694, %v2163
        %v2165 = vpop.f32.mrb[0].mxu0
        %v2166 = vadd.f32 %v1694, %v2165
        %2167 = vmatprep.mubr.f32.mxu0 0.0
        %2168 = vmatmul.mubr.f32.gmra.mrb[0].mxu0 %v1729
        %v2169 = vpop.f32.mrb[0].mxu0
        %v2170 = vadd.f32 %v1699, %v2169
        %v2171 = vpop.f32.mrb[0].mxu0
        %v2172 = vadd.f32 %v1699, %v2171
        %2173 = vmatprep.mubr.f32.mxu0 0.0
        %2174 = vmatmul.mubr.f32.gmra.mrb[0].mxu0 %v1732
        %v2175 = vpop.f32.mrb[0].mxu0
        %v2176 = vadd.f32 %v1704, %v2175
        %v2177 = vpop.f32.mrb[0].mxu0
        %v2178 = vadd.f32 %v1704, %v2177
        %2179 = vmatprep.mubr.f32.mxu0 0.0
        %2180 = vmatmul.mubr.f32.gmra.mrb[0].mxu0 %v1735
        %v2181 = vpop.f32.mrb[0].mxu0
        %v2182 = vadd.f32 %v1709, %v2181
        %v2183 = vpop.f32.mrb[0].mxu0
        %v2184 = vadd.f32 %v1709, %v2183
        %2185 = vmatprep.mubr.f32.mxu0 0.0
        %2186 = vmatmul.mubr.f32.gmra.mrb[0].mxu0 %v1738
        %v2187 = vpop.f32.mrb[0].mxu0
        %v2188 = vadd.f32 %v1714, %v2187
        %v2189 = vpop.f32.mrb[0].mxu0
        %v2190 = vadd.f32 %v1714, %v2189
        %2191 = vdwg.mxu0
        %v2192 = vmax.f32 %v1807, 0.0
        %v2193 = vmax.f32 %v1809, 0.0
        %v2194 = vmax.f32 %v1920, 0.0
        %v2195 = vmax.f32 %v1922, 0.0
        %v2196 = vmax.f32 %v2033, 0.0
        %v2197 = vmax.f32 %v2035, 0.0
        %v2198 = vmax.f32 %v2146, 0.0
        %v2199 = vmax.f32 %v2148, 0.0
        %v2200 = vmax.f32 %v1813, 0.0
        %v2201 = vmax.f32 %v1815, 0.0
        %v2202 = vmax.f32 %v1926, 0.0
        %v2203 = vmax.f32 %v1928, 0.0
        %v2204 = vmax.f32 %v2039, 0.0
        %v2205 = vmax.f32 %v2041, 0.0
        %v2206 = vmax.f32 %v2152, 0.0
        %v2207 = vmax.f32 %v2154, 0.0
        %v2208 = vmax.f32 %v1819, 0.0
        %v2209 = vmax.f32 %v1821, 0.0
        %v2210 = vmax.f32 %v1932, 0.0
        %v2211 = vmax.f32 %v1934, 0.0
        %v2212 = vmax.f32 %v2045, 0.0
        %v2213 = vmax.f32 %v2047, 0.0
        %v2214 = vmax.f32 %v2158, 0.0
        %v2215 = vmax.f32 %v2160, 0.0
        %v2216 = vmax.f32 %v1825, 0.0
        %v2217 = vmax.f32 %v1827, 0.0
        %v2218 = vmax.f32 %v1938, 0.0
        %v2219 = vmax.f32 %v1940, 0.0
        %v2220 = vmax.f32 %v2051, 0.0
        %v2221 = vmax.f32 %v2053, 0.0
        %v2222 = vmax.f32 %v2164, 0.0
        %v2223 = vmax.f32 %v2166, 0.0
        %v2224 = vmax.f32 %v1831, 0.0
        %v2225 = vmax.f32 %v1833, 0.0
        %v2226 = vmax.f32 %v1944, 0.0
        %v2227 = vmax.f32 %v1946, 0.0
        %v2228 = vmax.f32 %v2057, 0.0
        %v2229 = vmax.f32 %v2059, 0.0
        %v2230 = vmax.f32 %v2170, 0.0
        %v2231 = vmax.f32 %v2172, 0.0
        %v2232 = vmax.f32 %v1837, 0.0
        %v2233 = vmax.f32 %v1839, 0.0
        %v2234 = vmax.f32 %v1950, 0.0
        %v2235 = vmax.f32 %v1952, 0.0
        %v2236 = vmax.f32 %v2063, 0.0
        %v2237 = vmax.f32 %v2065, 0.0
        %v2238 = vmax.f32 %v2176, 0.0
        %v2239 = vmax.f32 %v2178, 0.0
        %v2240 = vmax.f32 %v1843, 0.0
        %v2241 = vmax.f32 %v1845, 0.0
        %v2242 = vmax.f32 %v1956, 0.0
        %v2243 = vmax.f32 %v1958, 0.0
        %v2244 = vmax.f32 %v2069, 0.0
        %v2245 = vmax.f32 %v2071, 0.0
        %v2246 = vmax.f32 %v2182, 0.0
        %v2247 = vmax.f32 %v2184, 0.0
        %v2248 = vmax.f32 %v1849, 0.0
        %v2249 = vmax.f32 %v1851, 0.0
        %v2250 = vmax.f32 %v1962, 0.0
        %v2251 = vmax.f32 %v1964, 0.0
        %v2252 = vmax.f32 %v2075, 0.0
        %v2253 = vmax.f32 %v2077, 0.0
        %v2254 = vmax.f32 %v2188, 0.0
        %v2255 = vmax.f32 %v2190, 0.0
        %v2256 = vld [vmem:[%s456] sm:$0x1]
        %v2257 = vld [vmem:[#allocation2] sm:$0x1]
        %2259 = vset.pattern.permute.xlu0 0
        %2260 = vperm.xlu0 %2259, %v2257
        %v2261 = vpop.permute.xlu0 %2260
        %v2263 = vlaneseq
        %v2264 = vshrl.u32 %v2263, 7
        %v2265 = vsub.s32 0, %v2264
        %v2266 = vrot.slane %v2261, %v2265
        %v2268 = vsel %vm1119, %v2256, 0
        %2270 = vmatprep.subr.mxu0 %v2193
        %2271 = vmatpush1.msra.mxu0 %v2192
        %2272 = vmatprep.subr.mxu0 %v2201
        %2273 = vmatpush1.msra.mxu0 %v2200
        %2274 = vmatprep.subr.mxu0 %v2209
        %2275 = vmatpush1.msra.mxu0 %v2208
        %2276 = vmatprep.subr.mxu0 %v2217
        %2277 = vmatpush1.msra.mxu0 %v2216
        %2278 = vmatprep.subr.mxu0 %v2225
        %2279 = vmatpush1.msra.mxu0 %v2224
        %2280 = vmatprep.subr.mxu0 %v2233
        %2281 = vmatpush1.msra.mxu0 %v2232
        %2282 = vmatprep.subr.mxu0 %v2241
        %2283 = vmatpush1.msra.mxu0 %v2240
        %2284 = vmatprep.subr.mxu0 %v2249
        %2285 = vmatpush1.msra.mxu0 %v2248
        %2286 = vmatprep.subr.mxu0 0.0
        %2287 = vmatpush1.msra.mxu0 0.0
        %2288 = vmatprep.subr.mxu0 0.0
        %2289 = vmatpush1.msra.mxu0 0.0
        %2290 = vmatprep.subr.mxu0 0.0
        %2291 = vmatpush1.msra.mxu0 0.0
        %2292 = vmatprep.subr.mxu0 0.0
        %2293 = vmatpush1.msra.mxu0 0.0
        %2294 = vmatprep.subr.mxu0 0.0
        %2295 = vmatpush1.msra.mxu0 0.0
        %2296 = vmatprep.subr.mxu0 0.0
        %2297 = vmatpush1.msra.mxu0 0.0
        %2298 = vmatprep.subr.mxu0 0.0
        %2299 = vmatpush1.msra.mxu0 0.0
        %2300 = vmatprep.subr.mxu0 0.0
        %2301 = vmatpush1.msra.mxu0 0.0
        %2302 = vmatprep.subr.mxu0 0.0
        %2303 = vmatpush1.msra.mxu0 0.0
        %2304 = vmatprep.subr.mxu0 0.0
        %2305 = vmatpush1.msra.mxu0 0.0
        %2306 = vmatprep.subr.mxu0 0.0
        %2307 = vmatpush1.msra.mxu0 0.0
        %2308 = vmatprep.subr.mxu0 0.0
        %2309 = vmatpush1.msra.mxu0 0.0
        %2310 = vmatprep.subr.mxu0 0.0
        %2311 = vmatpush1.msra.mxu0 0.0
        %2312 = vmatprep.subr.mxu0 0.0
        %2313 = vmatpush1.msra.mxu0 0.0
        %2314 = vmatprep.subr.mxu0 0.0
        %2315 = vmatpush1.msra.mxu0 0.0
        %2316 = vmatprep.subr.mxu0 0.0
        %2317 = vmatpush1.msra.mxu0 0.0
        %2318 = vmatprep.subr.mxu0 0.0
        %2319 = vmatpush1.msra.mxu0 0.0
        %2320 = vmatprep.subr.mxu0 0.0
        %2321 = vmatpush1.msra.mxu0 0.0
        %2322 = vmatprep.subr.mxu0 0.0
        %2323 = vmatpush1.msra.mxu0 0.0
        %2324 = vmatprep.subr.mxu0 0.0
        %2325 = vmatpush1.msra.mxu0 0.0
        %2326 = vmatprep.subr.mxu0 0.0
        %2327 = vmatpush1.msra.mxu0 0.0
        %2328 = vmatprep.subr.mxu0 0.0
        %2329 = vmatpush1.msra.mxu0 0.0
        %2330 = vmatprep.subr.mxu0 0.0
        %2331 = vmatpush1.msra.mxu0 0.0
        %2332 = vmatprep.subr.mxu0 0.0
        %2333 = vmatpush1.msra.mxu0 0.0
        %2334 = vmatprep.mubr.f32.mxu0 0.0
        %2335 = vmatmul.mubr.f32.gmra.mrb[0].mxu0 %v2268
        %v2336 = vpop.f32.mrb[0].mxu0
        %v2337 = vadd.f32 %v2266, %v2336
        %v2338 = vpop.f32.mrb[0].mxu0
        %v2339 = vadd.f32 %v2266, %v2338
        %2340 = vdwg.mxu0
        %2341 = vmatprep.subr.mxu0 %v2195
        %2342 = vmatpush1.msra.mxu0 %v2194
        %2343 = vmatprep.subr.mxu0 %v2203
        %2344 = vmatpush1.msra.mxu0 %v2202
        %2345 = vmatprep.subr.mxu0 %v2211
        %2346 = vmatpush1.msra.mxu0 %v2210
        %2347 = vmatprep.subr.mxu0 %v2219
        %2348 = vmatpush1.msra.mxu0 %v2218
        %2349 = vmatprep.subr.mxu0 %v2227
        %2350 = vmatpush1.msra.mxu0 %v2226
        %2351 = vmatprep.subr.mxu0 %v2235
        %2352 = vmatpush1.msra.mxu0 %v2234
        %2353 = vmatprep.subr.mxu0 %v2243
        %2354 = vmatpush1.msra.mxu0 %v2242
        %2355 = vmatprep.subr.mxu0 %v2251
        %2356 = vmatpush1.msra.mxu0 %v2250
        %2357 = vmatprep.subr.mxu0 0.0
        %2358 = vmatpush1.msra.mxu0 0.0
        %2359 = vmatprep.subr.mxu0 0.0
        %2360 = vmatpush1.msra.mxu0 0.0
        %2361 = vmatprep.subr.mxu0 0.0
        %2362 = vmatpush1.msra.mxu0 0.0
        %2363 = vmatprep.subr.mxu0 0.0
        %2364 = vmatpush1.msra.mxu0 0.0
        %2365 = vmatprep.subr.mxu0 0.0
        %2366 = vmatpush1.msra.mxu0 0.0
        %2367 = vmatprep.subr.mxu0 0.0
        %2368 = vmatpush1.msra.mxu0 0.0
        %2369 = vmatprep.subr.mxu0 0.0
        %2370 = vmatpush1.msra.mxu0 0.0
        %2371 = vmatprep.subr.mxu0 0.0
        %2372 = vmatpush1.msra.mxu0 0.0
        %2373 = vmatprep.subr.mxu0 0.0
        %2374 = vmatpush1.msra.mxu0 0.0
        %2375 = vmatprep.subr.mxu0 0.0
        %2376 = vmatpush1.msra.mxu0 0.0
        %2377 = vmatprep.subr.mxu0 0.0
        %2378 = vmatpush1.msra.mxu0 0.0
        %2379 = vmatprep.subr.mxu0 0.0
        %2380 = vmatpush1.msra.mxu0 0.0
        %2381 = vmatprep.subr.mxu0 0.0
        %2382 = vmatpush1.msra.mxu0 0.0
        %2383 = vmatprep.subr.mxu0 0.0
        %2384 = vmatpush1.msra.mxu0 0.0
        %2385 = vmatprep.subr.mxu0 0.0
        %2386 = vmatpush1.msra.mxu0 0.0
        %2387 = vmatprep.subr.mxu0 0.0
        %2388 = vmatpush1.msra.mxu0 0.0
        %2389 = vmatprep.subr.mxu0 0.0
        %2390 = vmatpush1.msra.mxu0 0.0
        %2391 = vmatprep.subr.mxu0 0.0
        %2392 = vmatpush1.msra.mxu0 0.0
        %2393 = vmatprep.subr.mxu0 0.0
        %2394 = vmatpush1.msra.mxu0 0.0
        %2395 = vmatprep.subr.mxu0 0.0
        %2396 = vmatpush1.msra.mxu0 0.0
        %2397 = vmatprep.subr.mxu0 0.0
        %2398 = vmatpush1.msra.mxu0 0.0
        %2399 = vmatprep.subr.mxu0 0.0
        %2400 = vmatpush1.msra.mxu0 0.0
        %2401 = vmatprep.subr.mxu0 0.0
        %2402 = vmatpush1.msra.mxu0 0.0
        %2403 = vmatprep.subr.mxu0 0.0
        %2404 = vmatpush1.msra.mxu0 0.0
        %2405 = vmatprep.mubr.f32.mxu0 0.0
        %2406 = vmatmul.mubr.f32.gmra.mrb[0].mxu0 %v2268
        %v2407 = vpop.f32.mrb[0].mxu0
        %v2408 = vadd.f32 %v2266, %v2407
        %v2409 = vpop.f32.mrb[0].mxu0
        %v2410 = vadd.f32 %v2266, %v2409
        %2411 = vdwg.mxu0
        %2412 = vmatprep.subr.mxu0 %v2197
        %2413 = vmatpush1.msra.mxu0 %v2196
        %2414 = vmatprep.subr.mxu0 %v2205
        %2415 = vmatpush1.msra.mxu0 %v2204
        %2416 = vmatprep.subr.mxu0 %v2213
        %2417 = vmatpush1.msra.mxu0 %v2212
        %2418 = vmatprep.subr.mxu0 %v2221
        %2419 = vmatpush1.msra.mxu0 %v2220
        %2420 = vmatprep.subr.mxu0 %v2229
        %2421 = vmatpush1.msra.mxu0 %v2228
        %2422 = vmatprep.subr.mxu0 %v2237
        %2423 = vmatpush1.msra.mxu0 %v2236
        %2424 = vmatprep.subr.mxu0 %v2245
        %2425 = vmatpush1.msra.mxu0 %v2244
        %2426 = vmatprep.subr.mxu0 %v2253
        %2427 = vmatpush1.msra.mxu0 %v2252
        %2428 = vmatprep.subr.mxu0 0.0
        %2429 = vmatpush1.msra.mxu0 0.0
        %2430 = vmatprep.subr.mxu0 0.0
        %2431 = vmatpush1.msra.mxu0 0.0
        %2432 = vmatprep.subr.mxu0 0.0
        %2433 = vmatpush1.msra.mxu0 0.0
        %2434 = vmatprep.subr.mxu0 0.0
        %2435 = vmatpush1.msra.mxu0 0.0
        %2436 = vmatprep.subr.mxu0 0.0
        %2437 = vmatpush1.msra.mxu0 0.0
        %2438 = vmatprep.subr.mxu0 0.0
        %2439 = vmatpush1.msra.mxu0 0.0
        %2440 = vmatprep.subr.mxu0 0.0
        %2441 = vmatpush1.msra.mxu0 0.0
        %2442 = vmatprep.subr.mxu0 0.0
        %2443 = vmatpush1.msra.mxu0 0.0
        %2444 = vmatprep.subr.mxu0 0.0
        %2445 = vmatpush1.msra.mxu0 0.0
        %2446 = vmatprep.subr.mxu0 0.0
        %2447 = vmatpush1.msra.mxu0 0.0
        %2448 = vmatprep.subr.mxu0 0.0
        %2449 = vmatpush1.msra.mxu0 0.0
        %2450 = vmatprep.subr.mxu0 0.0
        %2451 = vmatpush1.msra.mxu0 0.0
        %2452 = vmatprep.subr.mxu0 0.0
        %2453 = vmatpush1.msra.mxu0 0.0
        %2454 = vmatprep.subr.mxu0 0.0
        %2455 = vmatpush1.msra.mxu0 0.0
        %2456 = vmatprep.subr.mxu0 0.0
        %2457 = vmatpush1.msra.mxu0 0.0
        %2458 = vmatprep.subr.mxu0 0.0
        %2459 = vmatpush1.msra.mxu0 0.0
        %2460 = vmatprep.subr.mxu0 0.0
        %2461 = vmatpush1.msra.mxu0 0.0
        %2462 = vmatprep.subr.mxu0 0.0
        %2463 = vmatpush1.msra.mxu0 0.0
        %2464 = vmatprep.subr.mxu0 0.0
        %2465 = vmatpush1.msra.mxu0 0.0
        %2466 = vmatprep.subr.mxu0 0.0
        %2467 = vmatpush1.msra.mxu0 0.0
        %2468 = vmatprep.subr.mxu0 0.0
        %2469 = vmatpush1.msra.mxu0 0.0
        %2470 = vmatprep.subr.mxu0 0.0
        %2471 = vmatpush1.msra.mxu0 0.0
        %2472 = vmatprep.subr.mxu0 0.0
        %2473 = vmatpush1.msra.mxu0 0.0
        %2474 = vmatprep.subr.mxu0 0.0
        %2475 = vmatpush1.msra.mxu0 0.0
        %2476 = vmatprep.mubr.f32.mxu0 0.0
        %2477 = vmatmul.mubr.f32.gmra.mrb[0].mxu0 %v2268
        %v2478 = vpop.f32.mrb[0].mxu0
        %v2479 = vadd.f32 %v2266, %v2478
        %v2480 = vpop.f32.mrb[0].mxu0
        %v2481 = vadd.f32 %v2266, %v2480
        %2482 = vdwg.mxu0
        %2483 = vmatprep.subr.mxu0 %v2199
        %2484 = vmatpush1.msra.mxu0 %v2198
        %2485 = vmatprep.subr.mxu0 %v2207
        %2486 = vmatpush1.msra.mxu0 %v2206
        %2487 = vmatprep.subr.mxu0 %v2215
        %2488 = vmatpush1.msra.mxu0 %v2214
        %2489 = vmatprep.subr.mxu0 %v2223
        %2490 = vmatpush1.msra.mxu0 %v2222
        %2491 = vmatprep.subr.mxu0 %v2231
        %2492 = vmatpush1.msra.mxu0 %v2230
        %2493 = vmatprep.subr.mxu0 %v2239
        %2494 = vmatpush1.msra.mxu0 %v2238
        %2495 = vmatprep.subr.mxu0 %v2247
        %2496 = vmatpush1.msra.mxu0 %v2246
        %2497 = vmatprep.subr.mxu0 %v2255
        %2498 = vmatpush1.msra.mxu0 %v2254
        %2499 = vmatprep.subr.mxu0 0.0
        %2500 = vmatpush1.msra.mxu0 0.0
        %2501 = vmatprep.subr.mxu0 0.0
        %2502 = vmatpush1.msra.mxu0 0.0
        %2503 = vmatprep.subr.mxu0 0.0
        %2504 = vmatpush1.msra.mxu0 0.0
        %2505 = vmatprep.subr.mxu0 0.0
        %2506 = vmatpush1.msra.mxu0 0.0
        %2507 = vmatprep.subr.mxu0 0.0
        %2508 = vmatpush1.msra.mxu0 0.0
        %2509 = vmatprep.subr.mxu0 0.0
        %2510 = vmatpush1.msra.mxu0 0.0
        %2511 = vmatprep.subr.mxu0 0.0
        %2512 = vmatpush1.msra.mxu0 0.0
        %2513 = vmatprep.subr.mxu0 0.0
        %2514 = vmatpush1.msra.mxu0 0.0
        %2515 = vmatprep.subr.mxu0 0.0
        %2516 = vmatpush1.msra.mxu0 0.0
        %2517 = vmatprep.subr.mxu0 0.0
        %2518 = vmatpush1.msra.mxu0 0.0
        %2519 = vmatprep.subr.mxu0 0.0
        %2520 = vmatpush1.msra.mxu0 0.0
        %2521 = vmatprep.subr.mxu0 0.0
        %2522 = vmatpush1.msra.mxu0 0.0
        %2523 = vmatprep.subr.mxu0 0.0
        %2524 = vmatpush1.msra.mxu0 0.0
        %2525 = vmatprep.subr.mxu0 0.0
        %2526 = vmatpush1.msra.mxu0 0.0
        %2527 = vmatprep.subr.mxu0 0.0
        %2528 = vmatpush1.msra.mxu0 0.0
        %2529 = vmatprep.subr.mxu0 0.0
        %2530 = vmatpush1.msra.mxu0 0.0
        %2531 = vmatprep.subr.mxu0 0.0
        %2532 = vmatpush1.msra.mxu0 0.0
        %2533 = vmatprep.subr.mxu0 0.0
        %2534 = vmatpush1.msra.mxu0 0.0
        %2535 = vmatprep.subr.mxu0 0.0
        %2536 = vmatpush1.msra.mxu0 0.0
        %2537 = vmatprep.subr.mxu0 0.0
        %2538 = vmatpush1.msra.mxu0 0.0
        %2539 = vmatprep.subr.mxu0 0.0
        %2540 = vmatpush1.msra.mxu0 0.0
        %2541 = vmatprep.subr.mxu0 0.0
        %2542 = vmatpush1.msra.mxu0 0.0
        %2543 = vmatprep.subr.mxu0 0.0
        %2544 = vmatpush1.msra.mxu0 0.0
        %2545 = vmatprep.subr.mxu0 0.0
        %2546 = vmatpush1.msra.mxu0 0.0
        %2547 = vmatprep.mubr.f32.mxu0 0.0
        %2548 = vmatmul.mubr.f32.gmra.mrb[0].mxu0 %v2268
        %v2549 = vpop.f32.mrb[0].mxu0
        %v2550 = vadd.f32 %v2266, %v2549
        %v2551 = vpop.f32.mrb[0].mxu0
        %v2552 = vadd.f32 %v2266, %v2551
        %2553 = vdwg.mxu0
        %v2562 = vcombine.low %v2337, %v2339
        %v2563 = vcombine.low %v2408, %v2410
        %v2564 = vcombine.low %v2479, %v2481
        %v2565 = vcombine.low %v2550, %v2552
        %v2567 = vunpack.c.l.s4 1966171168
        %v2568 = vunpack.c.0.s8 %v2567
        %v2569 = vlaneseq
        %v2570 = vshrl.u32 %v2569, 7
        %v2571 = vsub.s32 %v2568, %v2570
        %v2572 = vrot.slane %v2562, %v2571
        %v2574 = vunpack.c.l.s4 1966171168
        %v2575 = vunpack.c.0.s8 %v2574
        %v2576 = vlaneseq
        %v2577 = vshrl.u32 %v2576, 7
        %v2578 = vsub.s32 %v2575, %v2577
        %v2579 = vrot.slane %v2563, %v2578
        %v2581 = vunpack.c.l.s4 1966171168
        %v2582 = vunpack.c.0.s8 %v2581
        %v2583 = vlaneseq
        %v2584 = vshrl.u32 %v2583, 7
        %v2585 = vsub.s32 %v2582, %v2584
        %v2586 = vrot.slane %v2564, %v2585
        %v2588 = vunpack.c.l.s4 1966171168
        %v2589 = vunpack.c.0.s8 %v2588
        %v2590 = vlaneseq
        %v2591 = vshrl.u32 %v2590, 7
        %v2592 = vsub.s32 %v2589, %v2591
        %v2593 = vrot.slane %v2565, %v2592
        %v2594 = vcombine.low %v2572, %v2579
        %v2595 = vcombine.low %v2586, %v2593
        %v2597 = vunpack.c.l.s4 1966171168
        %v2598 = vunpack.c.0.s8 %v2597
        %v2599 = vlaneseq
        %v2600 = vshrl.u32 %v2599, 7
        %v2601 = vsub.s32 %v2598, %v2600
        %v2602 = vrot.slane %v2594, %v2601
        %v2604 = vunpack.c.l.s4 1966171168
        %v2605 = vunpack.c.0.s8 %v2604
        %v2606 = vlaneseq
        %v2607 = vshrl.u32 %v2606, 7
        %v2608 = vsub.s32 %v2605, %v2607
        %v2609 = vrot.slane %v2595, %v2608
        %v2610 = vcombine.low %v2602, %v2609
        %2612 = vst [vmem:[%s433] sm:$0xff] %v2610
        %s2613 = sand.u32 %s266, 1
        %s2614 = scalar_lea.sflag [#allocation5], %s2613
        %s2615 = sand.u32 %s266, 1
        %s2616 = smul.addr %s2615, 8
        %s2617 = scalar_lea.vmem [#allocation6], %s2616
        // Predicated region
        $region61: #{tpu_custom_call.1} parent=55 // pred_check
          %p2618 = pneg %p276
        $region62: #{tpu_custom_call.1} parent=55 // pred_check_branch
          %2620 = sbr.rel (%p2618) target = $region64
        $region63: #{tpu_custom_call.1} parent=55 // pred_region
          %s2621 = smul.u32 8, %s33
          %s2623 = ssub.s32 128, 128
          %2624 = vsyncadd %s2614, %s2623
          %s2625 = smul.addr %s32, 8
          %s2626 = sadd.s32 %s2621, %s2625
          %s2627 = smul.addr %s2626, 16
          %s2628 = scalar_lea.hbm %s9, %s2627
          %s2630 = sshll.u32 %s2617, 4
          %s2631 = int_to_ptr.vmem [resolvable:$true] %s2630
          %2633 = dma.vmem_to_hbm [thread:$0]  %s2631, 128, %s2628, %s2614
        $region64: #{tpu_custom_call.1} parent=55 // pred_fallthru
          _
      $region56: #{tpu_custom_call.1} parent=5 // pred_fallthru
        _
      %p2634 = scmp.le.s32.totalorder 2, %s23
      // Predicated region
      $region65: #{tpu_custom_call.1} parent=5 // pred_check
        %p2635 = pneg %p2634
      $region66: #{tpu_custom_call.1} parent=5 // pred_check_branch
        %2637 = sbr.rel (%p2635) target = $region68
      $region67: #{tpu_custom_call.1} parent=5 // pred_region
        %s2638 = ssub.s32 %s23, 2
        // Predicated region
        $region69: #{tpu_custom_call.1} parent=67 // pred_check
          %p2639 = pneg %p282
        $region70: #{tpu_custom_call.1} parent=67 // pred_check_branch
          %2641 = sbr.rel (%p2639) target = $region72
        $region71: #{tpu_custom_call.1} parent=67 // pred_region
          %s2642 = sand.u32 %s267, 1
          %s2643 = scalar_lea.sflag [#allocation5], %s2642
          %s2644 = sand.u32 %s267, 1
          %s2645 = smul.addr %s2644, 8
          %s2646 = scalar_lea.vmem [#allocation6], %s2645
          %2647 = dma.done %s2643, 128
        $region72: #{tpu_custom_call.1} parent=67 // pred_fallthru
          _
      $region68: #{tpu_custom_call.1} parent=5 // pred_fallthru
        _
    $region6: #{tpu_custom_call.1} parent=1 // loop_footer
      %s27 = sadd.s32 1, %s23
    $region7: #{tpu_custom_call.1} parent=1 // loop_footer_branch
      %22 = sbr.rel target = $region3
    $region8: #{tpu_custom_call.1} parent=1 // loop_exit
      _
    %2648 = vsyncpa [#allocation4], 1
    %s2649 = scalar_lea.sflag [#allocation4], 1
    %2650 = vsyncpa %s2649, 1
    %2651 = vsyncpa [#allocation5], 1
    %s2652 = scalar_lea.sflag [#allocation5], 1
    %2653 = vsyncpa %s2652, 1

</llo_original>
